<compile_context>
chip_gen: v6e
topology: v6e:2x2x1
jax: 0.10.0
libtpu: 0.0.40
codegen_flags: <defaults>
</compile_context>

<pallas_src>
import jax
import jax.numpy as jnp
import numpy as np
from jax.experimental import pallas as pl
from jax.experimental.pallas import tpu as pltpu

# ---------------- config (small, consistent with the module) ----------------
HIDDEN = 32        # hidden_dim
SEGMENTS = 4       # s  (H * s == HIDDEN, W * s == HIDDEN)
EXPANSION = 2      # expansion_factor
B, H, W = 2, 8, 8
LN_EPS = 1e-5


# ---------------- in-kernel math helpers ----------------
def _gelu(x):
    # tanh-approx GELU (runs on the EUP); |err| vs exact erf-GELU < ~1e-3, inside test tol.
    return 0.5 * x * (1.0 + jnp.tanh(0.7978845608028654 * (x + 0.044715 * x * x * x)))


# ---------------- Kernel 1: LayerNorm1 fused with proj_c ----------------
def _ln_projc_kernel(x_ref, g_ref, b_ref, wc_ref, bc_ref, y_ref, xc_ref):
    x = x_ref[...]
    mu = jnp.mean(x, axis=-1, keepdims=True)
    d = x - mu
    var = jnp.mean(d * d, axis=-1, keepdims=True)
    y = d * jax.lax.rsqrt(var + LN_EPS) * g_ref[...] + b_ref[...]
    y_ref[...] = y
    xc_ref[...] = (jnp.dot(y.astype(jnp.bfloat16), wc_ref[...].astype(jnp.bfloat16),
                           preferred_element_type=jnp.float32) + bc_ref[...])


def ln_projc(x2d, gamma, beta, wc_t, bc):
    m, c = x2d.shape
    tiles = 2 if m % 2 == 0 else 1          # >=2 grid steps -> both v7x TensorCores
    tm = m // tiles
    row = lambda i: (i, 0)
    full = lambda i: (0, 0)
    return pl.pallas_call(
        _ln_projc_kernel,
        out_shape=(jax.ShapeDtypeStruct((m, c), x2d.dtype),
                   jax.ShapeDtypeStruct((m, c), x2d.dtype)),
        grid=(tiles,),
        in_specs=[pl.BlockSpec((tm, c), row),
                  pl.BlockSpec((1, c), full),
                  pl.BlockSpec((1, c), full),
                  pl.BlockSpec((c, c), full),
                  pl.BlockSpec((1, c), full)],
        out_specs=(pl.BlockSpec((tm, c), row), pl.BlockSpec((tm, c), row)),
        compiler_params=pltpu.CompilerParams(dimension_semantics=("parallel",)),
    )(x2d, gamma.reshape(1, c), beta.reshape(1, c), wc_t, bc.reshape(1, c))


# ---------------- Kernel 2: shared proj_h applied to both permuted branches ----------------
def _dual_proj_kernel(xh_ref, xw_ref, w_ref, b_ref, oh_ref, ow_ref):
    w = w_ref[...].astype(jnp.bfloat16)
    b = b_ref[...]
    oh_ref[...] = jnp.dot(xh_ref[...].astype(jnp.bfloat16), w,
                          preferred_element_type=jnp.float32) + b
    ow_ref[...] = jnp.dot(xw_ref[...].astype(jnp.bfloat16), w,
                          preferred_element_type=jnp.float32) + b


def dual_proj(xh_in, xw_in, wh_t, bh):
    m, k = xh_in.shape
    n = wh_t.shape[1]
    tiles = 2 if m % 2 == 0 else 1
    tm = m // tiles
    row = lambda i: (i, 0)
    full = lambda i: (0, 0)
    return pl.pallas_call(
        _dual_proj_kernel,
        out_shape=(jax.ShapeDtypeStruct((m, n), xh_in.dtype),
                   jax.ShapeDtypeStruct((m, n), xh_in.dtype)),
        grid=(tiles,),
        in_specs=[pl.BlockSpec((tm, k), row),
                  pl.BlockSpec((tm, k), row),
                  pl.BlockSpec((k, n), full),
                  pl.BlockSpec((1, n), full)],
        out_specs=(pl.BlockSpec((tm, n), row), pl.BlockSpec((tm, n), row)),
        compiler_params=pltpu.CompilerParams(dimension_semantics=("parallel",)),
    )(xh_in, xw_in, wh_t, bh.reshape(1, n))


# ---------------- Kernel 3: split attention + residual + LN2 + MLP + residual ----------------
def _gate_ffn_kernel(xh_ref, xw_ref, xc_ref, xres_ref,
                     sw1_ref, sw2_ref, g2_ref, b2_ref,
                     w1_ref, b1m_ref, w2_ref, b2m_ref, o_ref):
    xh = xh_ref[0]
    xw = xw_ref[0]
    xc = xc_ref[0]
    xres = xres_ref[0]
    c = xh.shape[-1]
    # SplitAttention gate: a = sum over the 3 branches and all spatial positions -> (1, c)
    a = jnp.sum(xh + xw + xc, axis=0, keepdims=True)
    h1 = _gelu(jnp.dot(a, sw1_ref[...], preferred_element_type=jnp.float32))
    hat = jnp.dot(h1, sw2_ref[...], preferred_element_type=jnp.float32)   # (1, 3c)
    h0 = hat[:, 0:c]
    ha = hat[:, c:2 * c]
    hb = hat[:, 2 * c:3 * c]
    mx = jnp.maximum(jnp.maximum(h0, ha), hb)
    e0 = jnp.exp(h0 - mx)
    e1 = jnp.exp(ha - mx)
    e2 = jnp.exp(hb - mx)
    inv = pl.reciprocal(e0 + e1 + e2, approx=True)
    # weighted sum over the 3 branches + the outer ViPBlock residual (+ x)
    x1 = (e0 * inv) * xh + (e1 * inv) * xw + (e2 * inv) * xc + xres       # (hw, c)
    # LayerNorm2 + Linear + GELU + Linear + residual
    mu = jnp.mean(x1, axis=-1, keepdims=True)
    d = x1 - mu
    var = jnp.mean(d * d, axis=-1, keepdims=True)
    y2 = d * jax.lax.rsqrt(var + LN_EPS) * g2_ref[...] + b2_ref[...]
    hmid = _gelu(jnp.dot(y2.astype(jnp.bfloat16), w1_ref[...].astype(jnp.bfloat16),
                         preferred_element_type=jnp.float32) + b1m_ref[...])
    o_ref[0] = (jnp.dot(hmid.astype(jnp.bfloat16), w2_ref[...].astype(jnp.bfloat16),
                        preferred_element_type=jnp.float32) + b2m_ref[...] + x1)


def gate_ffn(xh, xw, xc, xres, sw1_t, sw2_t, g2, b2, w1_t, b1, w2_t, b2m):
    b, hw, c = xh.shape
    e = w1_t.shape[1]
    per_b = lambda i: (i, 0, 0)
    full = lambda i: (0, 0)
    return pl.pallas_call(
        _gate_ffn_kernel,
        out_shape=jax.ShapeDtypeStruct((b, hw, c), xh.dtype),
        grid=(b,),
        in_specs=[pl.BlockSpec((1, hw, c), per_b)] * 4 + [
            pl.BlockSpec((c, c), full),
            pl.BlockSpec((c, 3 * c), full),
            pl.BlockSpec((1, c), full),
            pl.BlockSpec((1, c), full),
            pl.BlockSpec((c, e), full),
            pl.BlockSpec((1, e), full),
            pl.BlockSpec((e, c), full),
            pl.BlockSpec((1, c), full),
        ],
        out_specs=pl.BlockSpec((1, hw, c), per_b),
        compiler_params=pltpu.CompilerParams(dimension_semantics=("parallel",)),
    )(xh, xw, xc, xres, sw1_t, sw2_t, g2.reshape(1, c), b2.reshape(1, c),
      w1_t, b1.reshape(1, e), w2_t, b2m.reshape(1, c))


# ---------------- full ViPBlock forward (3 Pallas calls under one jit) ----------------
@jax.jit
def vip_block_forward(x, p):
    b, h, w, c = x.shape
    s = SEGMENTS
    cs = c // s
    hw = h * w

    # K1: LayerNorm1 + proj_c (produces both y and the x_c branch).
    y2d, xc2d = ln_projc(x.reshape(b * hw, c), p["ln1_g"], p["ln1_b"],
                         p["proj_c_wt"], p["proj_c_b"])
    y5 = y2d.reshape(b, h, w, cs, s)

    # einops layout glue (pure transposes; fused by XLA under the single jit).
    xh_in = y5.transpose(0, 2, 3, 1, 4).reshape(b * w * cs, h * s)  # 'b h w (c s) -> b w c (h s)'
    xw_in = y5.transpose(0, 1, 3, 2, 4).reshape(b * h * cs, w * s)  # 'b h w (c s) -> b h c (w s)'

    # K2: one kernel applies the shared proj_h weights to both permuted branches.
    # NOTE: the reference PyTorch code applies proj_h (not proj_w) to x_w; reproduced.
    xh_mid, xw_mid = dual_proj(xh_in, xw_in, p["proj_h_wt"], p["proj_h_b"])
    xh = xh_mid.reshape(b, w, cs, h, s).transpose(0, 3, 1, 2, 4).reshape(b, hw, c)
    xw = xw_mid.reshape(b, h, cs, w, s).transpose(0, 1, 3, 2, 4).reshape(b, hw, c)

    # K3: split attention + residual + LN2 + MLP + residual (one batch element per grid step).
    out = gate_ffn(xh, xw, xc2d.reshape(b, hw, c), x.reshape(b, hw, c),
                   p["sa_w1t"], p["sa_w2t"], p["ln2_g"], p["ln2_b"],
                   p["mlp_w1t"], p["mlp_b1"], p["mlp_w2t"], p["mlp_b2"])
    return out.reshape(b, h, w, c)


# ---------------- pure-JAX reference (f32, exact erf-GELU) ----------------
def _gelu_ref(x):
    return 0.5 * x * (1.0 + jax.lax.erf(x * 0.7071067811865476))


def vip_block_reference(x, p):
    b, h, w, c = x.shape
    s = SEGMENTS
    cs = c // s

    def ln(z, g, bta):
        mu = z.mean(-1, keepdims=True)
        v = ((z - mu) ** 2).mean(-1, keepdims=True)
        return (z - mu) * jax.lax.rsqrt(v + LN_EPS) * g + bta

    y = ln(x, p["ln1_g"], p["ln1_b"])
    xh = y.reshape(b, h, w, cs, s).transpose(0, 2, 3, 1, 4).reshape(b, w, cs, h * s)
    xh = xh @ p["proj_h_wt"] + p["proj_h_b"]
    xh = xh.reshape(b, w, cs, h, s).transpose(0, 3, 1, 2, 4).reshape(b, h, w, c)
    xw = y.reshape(b, h, w, cs, s).transpose(0, 1, 3, 2, 4).reshape(b, h, cs, w * s)
    xw = xw @ p["proj_h_wt"] + p["proj_h_b"]
    xw = xw.reshape(b, h, cs, w, s).transpose(0, 1, 3, 2, 4).reshape(b, h, w, c)
    xc = y @ p["proj_c_wt"] + p["proj_c_b"]
    xs = jnp.stack([xh, xw, xc], 1).reshape(b, 3, h * w, c)
    a = xs.sum(axis=(1, 2))
    hat = _gelu_ref(a @ p["sa_w1t"]) @ p["sa_w2t"]
    bar = jax.nn.softmax(hat.reshape(b, 3, c), axis=1)
    sa = (bar[:, :, None, :] * xs).sum(1).reshape(b, h, w, c)
    x1 = sa + x
    y2 = ln(x1, p["ln2_g"], p["ln2_b"])
    out = _gelu_ref(y2 @ p["mlp_w1t"] + p["mlp_b1"]) @ p["mlp_w2t"] + p["mlp_b2"]
    return out + x1


# ---------------- deterministic parameter init ----------------
def init_params(key):
    ks = jax.random.split(key, 10)
    c, e = HIDDEN, HIDDEN * EXPANSION
    n = lambda k, shp, sc=0.05: (sc * jax.random.normal(k, shp)).astype(jnp.float32)
    # Linear weights stored pre-transposed as (in_features, out_features) so the
    # forward pass never emits per-call .T transpose kernels (x @ Wt + b == x @ W.T + b).
    return dict(
        ln1_g=jnp.ones((c,), jnp.float32), ln1_b=jnp.zeros((c,), jnp.float32),
        proj_h_wt=n(ks[0], (c, c)), proj_h_b=n(ks[1], (c,)),
        proj_c_wt=n(ks[2], (c, c)), proj_c_b=n(ks[3], (c,)),
        sa_w1t=n(ks[4], (c, c)),               # SplitAttention.mlp1 (no bias)
        sa_w2t=n(ks[5], (c, 3 * c)),           # SplitAttention.mlp2 (no bias)
        ln2_g=jnp.ones((c,), jnp.float32), ln2_b=jnp.zeros((c,), jnp.float32),
        mlp_w1t=n(ks[6], (c, e)), mlp_b1=n(ks[7], (e,)),
        mlp_w2t=n(ks[8], (e, c)), mlp_b2=n(ks[9], (c,)),
    )


if __name__ == "__main__":
    key = jax.random.PRNGKey(0)
    kx, kp = jax.random.split(key)
    x = jax.random.normal(kx, (B, H, W, HIDDEN), dtype=jnp.float32)
    params = init_params(kp)

    out = jax.block_until_ready(vip_block_forward(x, params))
    ref = jax.block_until_ready(vip_block_reference(x, params))

    assert out.shape == (B, H, W, HIDDEN)
    # bf16 MXU operands + tanh-GELU consume part of the tolerance budget relative to
    # the exact-erf / f32 reference; 5e-3 keeps a meaningful correctness check.
    np.testing.assert_allclose(np.asarray(out), np.asarray(ref), rtol=5e-3, atol=5e-3)
    print("KERNEL_OK")
</pallas_src>

<mosaic_0001>
module attributes {stable_mosaic.version = 11 : i64} {
  func.func @_ln_projc_kernel(%arg0: i32, %arg1: memref<64x32xf32, #tpu.memory_space<vmem>>, %arg2: memref<1x32xf32, #tpu.memory_space<vmem>>, %arg3: memref<1x32xf32, #tpu.memory_space<vmem>>, %arg4: memref<32x32xf32, #tpu.memory_space<vmem>>, %arg5: memref<1x32xf32, #tpu.memory_space<vmem>>, %arg6: memref<64x32xf32, #tpu.memory_space<vmem>>, %arg7: memref<64x32xf32, #tpu.memory_space<vmem>>) attributes {dimension_semantics = [#tpu.dimension_semantics<parallel>], iteration_bounds = array<i64: 2>, scalar_prefetch = 0 : i64, scratch_operands = 0 : i64, tpu.core_type = #tpu.core_type<tc>, window_params = [{transform_indices = @transform_0, window_bounds = array<i64: 64, 32>}, {pipeline_mode = #tpu.pipeline_mode<synchronous>, transform_indices = @transform_1, window_bounds = array<i64: 1, 32>}, {pipeline_mode = #tpu.pipeline_mode<synchronous>, transform_indices = @transform_2, window_bounds = array<i64: 1, 32>}, {pipeline_mode = #tpu.pipeline_mode<synchronous>, transform_indices = @transform_3, window_bounds = array<i64: 32, 32>}, {pipeline_mode = #tpu.pipeline_mode<synchronous>, transform_indices = @transform_4, window_bounds = array<i64: 1, 32>}, {transform_indices = @transform_5, window_bounds = array<i64: 64, 32>}, {transform_indices = @transform_6, window_bounds = array<i64: 64, 32>}]} {
    %c0 = arith.constant 0 : index
    %c0_0 = arith.constant 0 : index
    %0 = vector.load %arg1[%c0, %c0_0] : memref<64x32xf32, #tpu.memory_space<vmem>>, vector<64x32xf32>
    %cst = arith.constant dense<0.000000e+00> : vector<64xf32>
    %1 = vector.multi_reduction <add>, %0, %cst [1] : vector<64x32xf32> to vector<64xf32>
    %2 = vector.shape_cast %1 : vector<64xf32> to vector<64x1xf32>
    %cst_1 = arith.constant 3.200000e+01 : f32
    %3 = vector.broadcast %cst_1 : f32 to vector<64x1xf32>
    %4 = arith.divf %2, %3 : vector<64x1xf32>
    %5 = vector.broadcast %4 : vector<64x1xf32> to vector<64x32xf32>
    %6 = arith.subf %0, %5 : vector<64x32xf32>
    %7 = arith.mulf %6, %6 : vector<64x32xf32>
    %cst_2 = arith.constant dense<0.000000e+00> : vector<64xf32>
    %8 = vector.multi_reduction <add>, %7, %cst_2 [1] : vector<64x32xf32> to vector<64xf32>
    %9 = vector.shape_cast %8 : vector<64xf32> to vector<64x1xf32>
    %cst_3 = arith.constant 3.200000e+01 : f32
    %10 = vector.broadcast %cst_3 : f32 to vector<64x1xf32>
    %11 = arith.divf %9, %10 : vector<64x1xf32>
    %cst_4 = arith.constant 9.99999974E-6 : f32
    %12 = vector.broadcast %cst_4 : f32 to vector<64x1xf32>
    %13 = arith.addf %11, %12 : vector<64x1xf32>
    %14 = math.rsqrt %13 : vector<64x1xf32>
    %15 = vector.broadcast %14 : vector<64x1xf32> to vector<64x32xf32>
    %16 = arith.mulf %6, %15 : vector<64x32xf32>
    %c0_5 = arith.constant 0 : index
    %c0_6 = arith.constant 0 : index
    %17 = vector.load %arg2[%c0_5, %c0_6] : memref<1x32xf32, #tpu.memory_space<vmem>>, vector<1x32xf32>
    %18 = vector.broadcast %17 : vector<1x32xf32> to vector<64x32xf32>
    %19 = arith.mulf %16, %18 : vector<64x32xf32>
    %c0_7 = arith.constant 0 : index
    %c0_8 = arith.constant 0 : index
    %20 = vector.load %arg3[%c0_7, %c0_8] : memref<1x32xf32, #tpu.memory_space<vmem>>, vector<1x32xf32>
    %21 = vector.broadcast %20 : vector<1x32xf32> to vector<64x32xf32>
    %22 = arith.addf %19, %21 : vector<64x32xf32>
    %c0_9 = arith.constant 0 : index
    %c0_10 = arith.constant 0 : index
    %23 = vector.load %arg6[%c0_9, %c0_10] : memref<64x32xf32, #tpu.memory_space<vmem>>, vector<64x32xf32>
    tpu.vector_store %arg6[%c0_9, %c0_10], %22 {strides = array<i32>} : memref<64x32xf32, #tpu.memory_space<vmem>>, vector<64x32xf32>,
    %24 = arith.truncf %22 : vector<64x32xf32> to vector<64x32xbf16>
    %c0_11 = arith.constant 0 : index
    %c0_12 = arith.constant 0 : index
    %25 = vector.load %arg4[%c0_11, %c0_12] : memref<32x32xf32, #tpu.memory_space<vmem>>, vector<32x32xf32>
    %26 = arith.truncf %25 : vector<32x32xf32> to vector<32x32xbf16>
    %cst_13 = arith.constant dense<0.000000e+00> : vector<64x32xf32>
    %27 = tpu.matmul %24, %26, %cst_13 {dimension_numbers = #tpu.dot_dimension_numbers<[1], [0], [0], [1], [0, 0, 1, 1], [], []>} : vector<64x32xbf16>, vector<32x32xbf16>, vector<64x32xf32> -> vector<64x32xf32>
    %c0_14 = arith.constant 0 : index
    %c0_15 = arith.constant 0 : index
    %28 = vector.load %arg5[%c0_14, %c0_15] : memref<1x32xf32, #tpu.memory_space<vmem>>, vector<1x32xf32>
    %29 = vector.broadcast %28 : vector<1x32xf32> to vector<64x32xf32>
    %30 = arith.addf %27, %29 : vector<64x32xf32>
    %c0_16 = arith.constant 0 : index
    %c0_17 = arith.constant 0 : index
    %31 = vector.load %arg7[%c0_16, %c0_17] : memref<64x32xf32, #tpu.memory_space<vmem>>, vector<64x32xf32>
    tpu.vector_store %arg7[%c0_16, %c0_17], %30 {strides = array<i32>} : memref<64x32xf32, #tpu.memory_space<vmem>>, vector<64x32xf32>,
    return
  }
  func.func @transform_0(%arg0: i32) -> (i32, i32) {
    %c0_i32 = arith.constant 0 : i32
    %c0_i32_0 = arith.constant 0 : i32
    return %arg0, %c0_i32 : i32, i32
  }
  func.func @transform_1(%arg0: i32) -> (i32, i32) {
    %c0_i32 = arith.constant 0 : i32
    %c0_i32_0 = arith.constant 0 : i32
    %c0_i32_1 = arith.constant 0 : i32
    return %c0_i32, %c0_i32_0 : i32, i32
  }
  func.func @transform_2(%arg0: i32) -> (i32, i32) {
    %c0_i32 = arith.constant 0 : i32
    %c0_i32_0 = arith.constant 0 : i32
    %c0_i32_1 = arith.constant 0 : i32
    return %c0_i32, %c0_i32_0 : i32, i32
  }
  func.func @transform_3(%arg0: i32) -> (i32, i32) {
    %c0_i32 = arith.constant 0 : i32
    %c0_i32_0 = arith.constant 0 : i32
    %c0_i32_1 = arith.constant 0 : i32
    return %c0_i32, %c0_i32_0 : i32, i32
  }
  func.func @transform_4(%arg0: i32) -> (i32, i32) {
    %c0_i32 = arith.constant 0 : i32
    %c0_i32_0 = arith.constant 0 : i32
    %c0_i32_1 = arith.constant 0 : i32
    return %c0_i32, %c0_i32_0 : i32, i32
  }
  func.func @transform_5(%arg0: i32) -> (i32, i32) {
    %c0_i32 = arith.constant 0 : i32
    %c0_i32_0 = arith.constant 0 : i32
    return %arg0, %c0_i32 : i32, i32
  }
  func.func @transform_6(%arg0: i32) -> (i32, i32) {
    %c0_i32 = arith.constant 0 : i32
    %c0_i32_0 = arith.constant 0 : i32
    return %arg0, %c0_i32 : i32, i32
  }
}

module attributes {stable_mosaic.version = 11 : i64} {
  func.func @_dual_proj_kernel(%arg0: i32, %arg1: memref<64x32xf32, #tpu.memory_space<vmem>>, %arg2: memref<64x32xf32, #tpu.memory_space<vmem>>, %arg3: memref<32x32xf32, #tpu.memory_space<vmem>>, %arg4: memref<1x32xf32, #tpu.memory_space<vmem>>, %arg5: memref<64x32xf32, #tpu.memory_space<vmem>>, %arg6: memref<64x32xf32, #tpu.memory_space<vmem>>) attributes {dimension_semantics = [#tpu.dimension_semantics<parallel>], iteration_bounds = array<i64: 2>, scalar_prefetch = 0 : i64, scratch_operands = 0 : i64, tpu.core_type = #tpu.core_type<tc>, window_params = [{transform_indices = @transform_0, window_bounds = array<i64: 64, 32>}, {transform_indices = @transform_1, window_bounds = array<i64: 64, 32>}, {pipeline_mode = #tpu.pipeline_mode<synchronous>, transform_indices = @transform_2, window_bounds = array<i64: 32, 32>}, {pipeline_mode = #tpu.pipeline_mode<synchronous>, transform_indices = @transform_3, window_bounds = array<i64: 1, 32>}, {transform_indices = @transform_4, window_bounds = array<i64: 64, 32>}, {transform_indices = @transform_5, window_bounds = array<i64: 64, 32>}]} {
    %c0 = arith.constant 0 : index
    %c0_0 = arith.constant 0 : index
    %0 = vector.load %arg3[%c0, %c0_0] : memref<32x32xf32, #tpu.memory_space<vmem>>, vector<32x32xf32>
    %1 = arith.truncf %0 : vector<32x32xf32> to vector<32x32xbf16>
    %c0_1 = arith.constant 0 : index
    %c0_2 = arith.constant 0 : index
    %2 = vector.load %arg4[%c0_1, %c0_2] : memref<1x32xf32, #tpu.memory_space<vmem>>, vector<1x32xf32>
    %c0_3 = arith.constant 0 : index
    %c0_4 = arith.constant 0 : index
    %3 = vector.load %arg1[%c0_3, %c0_4] : memref<64x32xf32, #tpu.memory_space<vmem>>, vector<64x32xf32>
    %4 = arith.truncf %3 : vector<64x32xf32> to vector<64x32xbf16>
    %cst = arith.constant dense<0.000000e+00> : vector<64x32xf32>
    %5 = tpu.matmul %4, %1, %cst {dimension_numbers = #tpu.dot_dimension_numbers<[1], [0], [0], [1], [0, 0, 1, 1], [], []>} : vector<64x32xbf16>, vector<32x32xbf16>, vector<64x32xf32> -> vector<64x32xf32>
    %6 = vector.broadcast %2 : vector<1x32xf32> to vector<64x32xf32>
    %7 = arith.addf %5, %6 : vector<64x32xf32>
    %c0_5 = arith.constant 0 : index
    %c0_6 = arith.constant 0 : index
    %8 = vector.load %arg5[%c0_5, %c0_6] : memref<64x32xf32, #tpu.memory_space<vmem>>, vector<64x32xf32>
    tpu.vector_store %arg5[%c0_5, %c0_6], %7 {strides = array<i32>} : memref<64x32xf32, #tpu.memory_space<vmem>>, vector<64x32xf32>,
    %c0_7 = arith.constant 0 : index
    %c0_8 = arith.constant 0 : index
    %9 = vector.load %arg2[%c0_7, %c0_8] : memref<64x32xf32, #tpu.memory_space<vmem>>, vector<64x32xf32>
    %10 = arith.truncf %9 : vector<64x32xf32> to vector<64x32xbf16>
    %cst_9 = arith.constant dense<0.000000e+00> : vector<64x32xf32>
    %11 = tpu.matmul %10, %1, %cst_9 {dimension_numbers = #tpu.dot_dimension_numbers<[1], [0], [0], [1], [0, 0, 1, 1], [], []>} : vector<64x32xbf16>, vector<32x32xbf16>, vector<64x32xf32> -> vector<64x32xf32>
    %12 = vector.broadcast %2 : vector<1x32xf32> to vector<64x32xf32>
    %13 = arith.addf %11, %12 : vector<64x32xf32>
    %c0_10 = arith.constant 0 : index
    %c0_11 = arith.constant 0 : index
    %14 = vector.load %arg6[%c0_10, %c0_11] : memref<64x32xf32, #tpu.memory_space<vmem>>, vector<64x32xf32>
    tpu.vector_store %arg6[%c0_10, %c0_11], %13 {strides = array<i32>} : memref<64x32xf32, #tpu.memory_space<vmem>>, vector<64x32xf32>,
    return
  }
  func.func @transform_0(%arg0: i32) -> (i32, i32) {
    %c0_i32 = arith.constant 0 : i32
    %c0_i32_0 = arith.constant 0 : i32
    return %arg0, %c0_i32 : i32, i32
  }
  func.func @transform_1(%arg0: i32) -> (i32, i32) {
    %c0_i32 = arith.constant 0 : i32
    %c0_i32_0 = arith.constant 0 : i32
    return %arg0, %c0_i32 : i32, i32
  }
  func.func @transform_2(%arg0: i32) -> (i32, i32) {
    %c0_i32 = arith.constant 0 : i32
    %c0_i32_0 = arith.constant 0 : i32
    %c0_i32_1 = arith.constant 0 : i32
    return %c0_i32, %c0_i32_0 : i32, i32
  }
  func.func @transform_3(%arg0: i32) -> (i32, i32) {
    %c0_i32 = arith.constant 0 : i32
    %c0_i32_0 = arith.constant 0 : i32
    %c0_i32_1 = arith.constant 0 : i32
    return %c0_i32, %c0_i32_0 : i32, i32
  }
  func.func @transform_4(%arg0: i32) -> (i32, i32) {
    %c0_i32 = arith.constant 0 : i32
    %c0_i32_0 = arith.constant 0 : i32
    return %arg0, %c0_i32 : i32, i32
  }
  func.func @transform_5(%arg0: i32) -> (i32, i32) {
    %c0_i32 = arith.constant 0 : i32
    %c0_i32_0 = arith.constant 0 : i32
    return %arg0, %c0_i32 : i32, i32
  }
}

module attributes {stable_mosaic.version = 11 : i64} {
  func.func @_gate_ffn_kernel(%arg0: i32, %arg1: memref<1x64x32xf32, #tpu.memory_space<vmem>>, %arg2: memref<1x64x32xf32, #tpu.memory_space<vmem>>, %arg3: memref<1x64x32xf32, #tpu.memory_space<vmem>>, %arg4: memref<1x64x32xf32, #tpu.memory_space<vmem>>, %arg5: memref<32x32xf32, #tpu.memory_space<vmem>>, %arg6: memref<32x96xf32, #tpu.memory_space<vmem>>, %arg7: memref<1x32xf32, #tpu.memory_space<vmem>>, %arg8: memref<1x32xf32, #tpu.memory_space<vmem>>, %arg9: memref<32x64xf32, #tpu.memory_space<vmem>>, %arg10: memref<1x64xf32, #tpu.memory_space<vmem>>, %arg11: memref<64x32xf32, #tpu.memory_space<vmem>>, %arg12: memref<1x32xf32, #tpu.memory_space<vmem>>, %arg13: memref<1x64x32xf32, #tpu.memory_space<vmem>>) attributes {dimension_semantics = [#tpu.dimension_semantics<parallel>], iteration_bounds = array<i64: 2>, scalar_prefetch = 0 : i64, scratch_operands = 0 : i64, tpu.core_type = #tpu.core_type<tc>, window_params = [{transform_indices = @transform_0, window_bounds = array<i64: 1, 64, 32>}, {transform_indices = @transform_1, window_bounds = array<i64: 1, 64, 32>}, {transform_indices = @transform_2, window_bounds = array<i64: 1, 64, 32>}, {transform_indices = @transform_3, window_bounds = array<i64: 1, 64, 32>}, {pipeline_mode = #tpu.pipeline_mode<synchronous>, transform_indices = @transform_4, window_bounds = array<i64: 32, 32>}, {pipeline_mode = #tpu.pipeline_mode<synchronous>, transform_indices = @transform_5, window_bounds = array<i64: 32, 96>}, {pipeline_mode = #tpu.pipeline_mode<synchronous>, transform_indices = @transform_6, window_bounds = array<i64: 1, 32>}, {pipeline_mode = #tpu.pipeline_mode<synchronous>, transform_indices = @transform_7, window_bounds = array<i64: 1, 32>}, {pipeline_mode = #tpu.pipeline_mode<synchronous>, transform_indices = @transform_8, window_bounds = array<i64: 32, 64>}, {pipeline_mode = #tpu.pipeline_mode<synchronous>, transform_indices = @transform_9, window_bounds = array<i64: 1, 64>}, {pipeline_mode = #tpu.pipeline_mode<synchronous>, transform_indices = @transform_10, window_bounds = array<i64: 64, 32>}, {pipeline_mode = #tpu.pipeline_mode<synchronous>, transform_indices = @transform_11, window_bounds = array<i64: 1, 32>}, {transform_indices = @transform_12, window_bounds = array<i64: 1, 64, 32>}]} {
    %c0 = arith.constant 0 : index
    %c0_0 = arith.constant 0 : index
    %c0_1 = arith.constant 0 : index
    %0 = vector.load %arg1[%c0, %c0_0, %c0_1] : memref<1x64x32xf32, #tpu.memory_space<vmem>>, vector<1x64x32xf32>
    %1 = vector.shape_cast %0 : vector<1x64x32xf32> to vector<64x32xf32>
    %c0_2 = arith.constant 0 : index
    %c0_3 = arith.constant 0 : index
    %c0_4 = arith.constant 0 : index
    %2 = vector.load %arg2[%c0_2, %c0_3, %c0_4] : memref<1x64x32xf32, #tpu.memory_space<vmem>>, vector<1x64x32xf32>
    %3 = vector.shape_cast %2 : vector<1x64x32xf32> to vector<64x32xf32>
    %c0_5 = arith.constant 0 : index
    %c0_6 = arith.constant 0 : index
    %c0_7 = arith.constant 0 : index
    %4 = vector.load %arg3[%c0_5, %c0_6, %c0_7] : memref<1x64x32xf32, #tpu.memory_space<vmem>>, vector<1x64x32xf32>
    %5 = vector.shape_cast %4 : vector<1x64x32xf32> to vector<64x32xf32>
    %c0_8 = arith.constant 0 : index
    %c0_9 = arith.constant 0 : index
    %c0_10 = arith.constant 0 : index
    %6 = vector.load %arg4[%c0_8, %c0_9, %c0_10] : memref<1x64x32xf32, #tpu.memory_space<vmem>>, vector<1x64x32xf32>
    %7 = vector.shape_cast %6 : vector<1x64x32xf32> to vector<64x32xf32>
    %8 = arith.addf %1, %3 : vector<64x32xf32>
    %9 = arith.addf %8, %5 : vector<64x32xf32>
    %cst = arith.constant dense<0.000000e+00> : vector<32xf32>
    %10 = vector.multi_reduction <add>, %9, %cst [0] : vector<64x32xf32> to vector<32xf32>
    %11 = vector.shape_cast %10 : vector<32xf32> to vector<1x32xf32>
    %c0_11 = arith.constant 0 : index
    %c0_12 = arith.constant 0 : index
    %12 = vector.load %arg5[%c0_11, %c0_12] : memref<32x32xf32, #tpu.memory_space<vmem>>, vector<32x32xf32>
    %cst_13 = arith.constant dense<0.000000e+00> : vector<1x32xf32>
    %13 = tpu.matmul %11, %12, %cst_13 {dimension_numbers = #tpu.dot_dimension_numbers<[1], [0], [0], [1], [0, 0, 1, 1], [], []>} : vector<1x32xf32>, vector<32x32xf32>, vector<1x32xf32> -> vector<1x32xf32>
    %cst_14 = arith.constant 5.000000e-01 : f32
    %14 = vector.broadcast %cst_14 : f32 to vector<1x32xf32>
    %15 = arith.mulf %14, %13 : vector<1x32xf32>
    %cst_15 = arith.constant 4.471500e-02 : f32
    %16 = vector.broadcast %cst_15 : f32 to vector<1x32xf32>
    %17 = arith.mulf %16, %13 : vector<1x32xf32>
    %18 = arith.mulf %17, %13 : vector<1x32xf32>
    %19 = arith.mulf %18, %13 : vector<1x32xf32>
    %20 = arith.addf %13, %19 : vector<1x32xf32>
    %cst_16 = arith.constant 0.797884583 : f32
    %21 = vector.broadcast %cst_16 : f32 to vector<1x32xf32>
    %22 = arith.mulf %21, %20 : vector<1x32xf32>
    %23 = math.tanh %22 : vector<1x32xf32>
    %cst_17 = arith.constant 1.000000e+00 : f32
    %24 = vector.broadcast %cst_17 : f32 to vector<1x32xf32>
    %25 = arith.addf %24, %23 : vector<1x32xf32>
    %26 = arith.mulf %15, %25 : vector<1x32xf32>
    %c0_18 = arith.constant 0 : index
    %c0_19 = arith.constant 0 : index
    %27 = vector.load %arg6[%c0_18, %c0_19] : memref<32x96xf32, #tpu.memory_space<vmem>>, vector<32x96xf32>
    %cst_20 = arith.constant dense<0.000000e+00> : vector<1x96xf32>
    %28 = tpu.matmul %26, %27, %cst_20 {dimension_numbers = #tpu.dot_dimension_numbers<[1], [0], [0], [1], [0, 0, 1, 1], [], []>} : vector<1x32xf32>, vector<32x96xf32>, vector<1x96xf32> -> vector<1x96xf32>
    %29 = vector.extract_strided_slice %28 {offsets = [0, 0], sizes = [1, 32], strides = [1, 1]} : vector<1x96xf32> to vector<1x32xf32>
    %30 = vector.extract_strided_slice %28 {offsets = [0, 32], sizes = [1, 32], strides = [1, 1]} : vector<1x96xf32> to vector<1x32xf32>
    %31 = vector.extract_strided_slice %28 {offsets = [0, 64], sizes = [1, 32], strides = [1, 1]} : vector<1x96xf32> to vector<1x32xf32>
    %32 = arith.maximumf %29, %30 : vector<1x32xf32>
    %33 = arith.maximumf %32, %31 : vector<1x32xf32>
    %34 = arith.subf %29, %33 : vector<1x32xf32>
    %35 = math.exp %34 : vector<1x32xf32>
    %36 = arith.subf %30, %33 : vector<1x32xf32>
    %37 = math.exp %36 : vector<1x32xf32>
    %38 = arith.subf %31, %33 : vector<1x32xf32>
    %39 = math.exp %38 : vector<1x32xf32>
    %40 = arith.addf %35, %37 : vector<1x32xf32>
    %41 = arith.addf %40, %39 : vector<1x32xf32>
    %42 = tpu.reciprocal %41 {approx = true} : vector<1x32xf32> -> vector<1x32xf32>
    %43 = arith.mulf %35, %42 : vector<1x32xf32>
    %44 = vector.broadcast %43 : vector<1x32xf32> to vector<64x32xf32>
    %45 = arith.mulf %44, %1 : vector<64x32xf32>
    %46 = arith.mulf %37, %42 : vector<1x32xf32>
    %47 = vector.broadcast %46 : vector<1x32xf32> to vector<64x32xf32>
    %48 = arith.mulf %47, %3 : vector<64x32xf32>
    %49 = arith.addf %45, %48 : vector<64x32xf32>
    %50 = arith.mulf %39, %42 : vector<1x32xf32>
    %51 = vector.broadcast %50 : vector<1x32xf32> to vector<64x32xf32>
    %52 = arith.mulf %51, %5 : vector<64x32xf32>
    %53 = arith.addf %49, %52 : vector<64x32xf32>
    %54 = arith.addf %53, %7 : vector<64x32xf32>
    %cst_21 = arith.constant dense<0.000000e+00> : vector<64xf32>
    %55 = vector.multi_reduction <add>, %54, %cst_21 [1] : vector<64x32xf32> to vector<64xf32>
    %56 = vector.shape_cast %55 : vector<64xf32> to vector<64x1xf32>
    %cst_22 = arith.constant 3.200000e+01 : f32
    %57 = vector.broadcast %cst_22 : f32 to vector<64x1xf32>
    %58 = arith.divf %56, %57 : vector<64x1xf32>
    %59 = vector.broadcast %58 : vector<64x1xf32> to vector<64x32xf32>
    %60 = arith.subf %54, %59 : vector<64x32xf32>
    %61 = arith.mulf %60, %60 : vector<64x32xf32>
    %cst_23 = arith.constant dense<0.000000e+00> : vector<64xf32>
    %62 = vector.multi_reduction <add>, %61, %cst_23 [1] : vector<64x32xf32> to vector<64xf32>
    %63 = vector.shape_cast %62 : vector<64xf32> to vector<64x1xf32>
    %cst_24 = arith.constant 3.200000e+01 : f32
    %64 = vector.broadcast %cst_24 : f32 to vector<64x1xf32>
    %65 = arith.divf %63, %64 : vector<64x1xf32>
    %cst_25 = arith.constant 9.99999974E-6 : f32
    %66 = vector.broadcast %cst_25 : f32 to vector<64x1xf32>
    %67 = arith.addf %65, %66 : vector<64x1xf32>
    %68 = math.rsqrt %67 : vector<64x1xf32>
    %69 = vector.broadcast %68 : vector<64x1xf32> to vector<64x32xf32>
    %70 = arith.mulf %60, %69 : vector<64x32xf32>
    %c0_26 = arith.constant 0 : index
    %c0_27 = arith.constant 0 : index
    %71 = vector.load %arg7[%c0_26, %c0_27] : memref<1x32xf32, #tpu.memory_space<vmem>>, vector<1x32xf32>
    %72 = vector.broadcast %71 : vector<1x32xf32> to vector<64x32xf32>
    %73 = arith.mulf %70, %72 : vector<64x32xf32>
    %c0_28 = arith.constant 0 : index
    %c0_29 = arith.constant 0 : index
    %74 = vector.load %arg8[%c0_28, %c0_29] : memref<1x32xf32, #tpu.memory_space<vmem>>, vector<1x32xf32>
    %75 = vector.broadcast %74 : vector<1x32xf32> to vector<64x32xf32>
    %76 = arith.addf %73, %75 : vector<64x32xf32>
    %77 = arith.truncf %76 : vector<64x32xf32> to vector<64x32xbf16>
    %c0_30 = arith.constant 0 : index
    %c0_31 = arith.constant 0 : index
    %78 = vector.load %arg9[%c0_30, %c0_31] : memref<32x64xf32, #tpu.memory_space<vmem>>, vector<32x64xf32>
    %79 = arith.truncf %78 : vector<32x64xf32> to vector<32x64xbf16>
    %cst_32 = arith.constant dense<0.000000e+00> : vector<64x64xf32>
    %80 = tpu.matmul %77, %79, %cst_32 {dimension_numbers = #tpu.dot_dimension_numbers<[1], [0], [0], [1], [0, 0, 1, 1], [], []>} : vector<64x32xbf16>, vector<32x64xbf16>, vector<64x64xf32> -> vector<64x64xf32>
    %c0_33 = arith.constant 0 : index
    %c0_34 = arith.constant 0 : index
    %81 = vector.load %arg10[%c0_33, %c0_34] : memref<1x64xf32, #tpu.memory_space<vmem>>, vector<1x64xf32>
    %82 = vector.broadcast %81 : vector<1x64xf32> to vector<64x64xf32>
    %83 = arith.addf %80, %82 : vector<64x64xf32>
    %cst_35 = arith.constant 5.000000e-01 : f32
    %84 = vector.broadcast %cst_35 : f32 to vector<64x64xf32>
    %85 = arith.mulf %84, %83 : vector<64x64xf32>
    %cst_36 = arith.constant 4.471500e-02 : f32
    %86 = vector.broadcast %cst_36 : f32 to vector<64x64xf32>
    %87 = arith.mulf %86, %83 : vector<64x64xf32>
    %88 = arith.mulf %87, %83 : vector<64x64xf32>
    %89 = arith.mulf %88, %83 : vector<64x64xf32>
    %90 = arith.addf %83, %89 : vector<64x64xf32>
    %cst_37 = arith.constant 0.797884583 : f32
    %91 = vector.broadcast %cst_37 : f32 to vector<64x64xf32>
    %92 = arith.mulf %91, %90 : vector<64x64xf32>
    %93 = math.tanh %92 : vector<64x64xf32>
    %cst_38 = arith.constant 1.000000e+00 : f32
    %94 = vector.broadcast %cst_38 : f32 to vector<64x64xf32>
    %95 = arith.addf %94, %93 : vector<64x64xf32>
    %96 = arith.mulf %85, %95 : vector<64x64xf32>
    %97 = arith.truncf %96 : vector<64x64xf32> to vector<64x64xbf16>
    %c0_39 = arith.constant 0 : index
    %c0_40 = arith.constant 0 : index
    %98 = vector.load %arg11[%c0_39, %c0_40] : memref<64x32xf32, #tpu.memory_space<vmem>>, vector<64x32xf32>
    %99 = arith.truncf %98 : vector<64x32xf32> to vector<64x32xbf16>
    %cst_41 = arith.constant dense<0.000000e+00> : vector<64x32xf32>
    %100 = tpu.matmul %97, %99, %cst_41 {dimension_numbers = #tpu.dot_dimension_numbers<[1], [0], [0], [1], [0, 0, 1, 1], [], []>} : vector<64x64xbf16>, vector<64x32xbf16>, vector<64x32xf32> -> vector<64x32xf32>
    %c0_42 = arith.constant 0 : index
    %c0_43 = arith.constant 0 : index
    %101 = vector.load %arg12[%c0_42, %c0_43] : memref<1x32xf32, #tpu.memory_space<vmem>>, vector<1x32xf32>
    %102 = vector.broadcast %101 : vector<1x32xf32> to vector<64x32xf32>
    %103 = arith.addf %100, %102 : vector<64x32xf32>
    %104 = arith.addf %103, %54 : vector<64x32xf32>
    %c0_44 = arith.constant 0 : index
    %c0_45 = arith.constant 0 : index
    %c0_46 = arith.constant 0 : index
    %105 = vector.load %arg13[%c0_44, %c0_45, %c0_46] : memref<1x64x32xf32, #tpu.memory_space<vmem>>, vector<1x64x32xf32>
    %106 = vector.shape_cast %105 : vector<1x64x32xf32> to vector<64x32xf32>
    %107 = vector.shape_cast %104 : vector<64x32xf32> to vector<1x64x32xf32>
    tpu.vector_store %arg13[%c0_44, %c0_45, %c0_46], %107 {strides = array<i32>} : memref<1x64x32xf32, #tpu.memory_space<vmem>>, vector<1x64x32xf32>,
    return
  }
  func.func @transform_0(%arg0: i32) -> (i32, i32, i32) {
    %c0_i32 = arith.constant 0 : i32
    %c0_i32_0 = arith.constant 0 : i32
    %c0_i32_1 = arith.constant 0 : i32
    return %arg0, %c0_i32, %c0_i32_0 : i32, i32, i32
  }
  func.func @transform_1(%arg0: i32) -> (i32, i32, i32) {
    %c0_i32 = arith.constant 0 : i32
    %c0_i32_0 = arith.constant 0 : i32
    %c0_i32_1 = arith.constant 0 : i32
    return %arg0, %c0_i32, %c0_i32_0 : i32, i32, i32
  }
  func.func @transform_2(%arg0: i32) -> (i32, i32, i32) {
    %c0_i32 = arith.constant 0 : i32
    %c0_i32_0 = arith.constant 0 : i32
    %c0_i32_1 = arith.constant 0 : i32
    return %arg0, %c0_i32, %c0_i32_0 : i32, i32, i32
  }
  func.func @transform_3(%arg0: i32) -> (i32, i32, i32) {
    %c0_i32 = arith.constant 0 : i32
    %c0_i32_0 = arith.constant 0 : i32
    %c0_i32_1 = arith.constant 0 : i32
    return %arg0, %c0_i32, %c0_i32_0 : i32, i32, i32
  }
  func.func @transform_4(%arg0: i32) -> (i32, i32) {
    %c0_i32 = arith.constant 0 : i32
    %c0_i32_0 = arith.constant 0 : i32
    %c0_i32_1 = arith.constant 0 : i32
    return %c0_i32, %c0_i32_0 : i32, i32
  }
  func.func @transform_5(%arg0: i32) -> (i32, i32) {
    %c0_i32 = arith.constant 0 : i32
    %c0_i32_0 = arith.constant 0 : i32
    %c0_i32_1 = arith.constant 0 : i32
    return %c0_i32, %c0_i32_0 : i32, i32
  }
  func.func @transform_6(%arg0: i32) -> (i32, i32) {
    %c0_i32 = arith.constant 0 : i32
    %c0_i32_0 = arith.constant 0 : i32
    %c0_i32_1 = arith.constant 0 : i32
    return %c0_i32, %c0_i32_0 : i32, i32
  }
  func.func @transform_7(%arg0: i32) -> (i32, i32) {
    %c0_i32 = arith.constant 0 : i32
    %c0_i32_0 = arith.constant 0 : i32
    %c0_i32_1 = arith.constant 0 : i32
    return %c0_i32, %c0_i32_0 : i32, i32
  }
  func.func @transform_8(%arg0: i32) -> (i32, i32) {
    %c0_i32 = arith.constant 0 : i32
    %c0_i32_0 = arith.constant 0 : i32
    %c0_i32_1 = arith.constant 0 : i32
    return %c0_i32, %c0_i32_0 : i32, i32
  }
  func.func @transform_9(%arg0: i32) -> (i32, i32) {
    %c0_i32 = arith.constant 0 : i32
    %c0_i32_0 = arith.constant 0 : i32
    %c0_i32_1 = arith.constant 0 : i32
    return %c0_i32, %c0_i32_0 : i32, i32
  }
  func.func @transform_10(%arg0: i32) -> (i32, i32) {
    %c0_i32 = arith.constant 0 : i32
    %c0_i32_0 = arith.constant 0 : i32
    %c0_i32_1 = arith.constant 0 : i32
    return %c0_i32, %c0_i32_0 : i32, i32
  }
  func.func @transform_11(%arg0: i32) -> (i32, i32) {
    %c0_i32 = arith.constant 0 : i32
    %c0_i32_0 = arith.constant 0 : i32
    %c0_i32_1 = arith.constant 0 : i32
    return %c0_i32, %c0_i32_0 : i32, i32
  }
  func.func @transform_12(%arg0: i32) -> (i32, i32, i32) {
    %c0_i32 = arith.constant 0 : i32
    %c0_i32_0 = arith.constant 0 : i32
    %c0_i32_1 = arith.constant 0 : i32
    return %arg0, %c0_i32, %c0_i32_0 : i32, i32, i32
  }
}

</mosaic_0001>

<llo_original>
// kernel: vip_block_forward.3
$region0: #{vip_block_forward.3}
  #allocation0 [shape = 'u32[]', space=smem, size = 0x4, offset = 0x4, fixed_abs, tag = 'smem constant byte address 0x4 - core index']
  #allocation1 [shape = 'u32[144,128]{1,0:T(1,128)}', space=vmem, size = 0x12000, scoped, tag = 'internal scratch']
  %s0 = inlined_call_operand.hbm [shape: f32[128,32], index: 0, kind: input, shape index: {}]
  %s1 = inlined_call_operand.vmem [shape: f32[1,32], index: 1, kind: input, shape index: {}]
  %s2 = inlined_call_operand.vmem [shape: f32[1,32], index: 2, kind: input, shape index: {}]
  %s3 = inlined_call_operand.hbm [shape: f32[32,32], index: 3, kind: input, shape index: {}]
  %s4 = inlined_call_operand.vmem [shape: f32[1,32], index: 4, kind: input, shape index: {}]
  %s5 = inlined_call_operand.vmem [shape: f32[128,32], index: 5, kind: output, shape index: {0}]
  %s6 = inlined_call_operand.vmem [shape: f32[128,32], index: 6, kind: output, shape index: {1}]
  %7 = xla_tuple %s5, %s6
  %s8 = sld [smem:[#allocation0]]
  $region69: #{vip_block_forward.3} parent=0
    _
  %s10 = ssub.s32 1, %s8
  %s11 = scalar_select 0, %s10, %s8
  $region1: #{vip_block_forward.3} parent=0
    #allocation2 [shape = 'u8[65536]{0}', space=vmem, size = 0x10000, scoped, tag = 'input window, operand 0']
    #allocation3 [shape = 's32[2]{0}', space=sflag, size = 0x8, scoped, tag = 'scoped memory for vip_block_forward.3']
    #allocation4 [shape = 'u8[16384]{0}', space=vmem, size = 0x4000, scoped, tag = 'input window, operand 3, single buffered']
    #allocation5 [shape = 's32[1]{0}', space=sflag, size = 0x4, scoped, tag = 'scoped memory for vip_block_forward.3']
    %12 = vsyncpa [#allocation3], 0
    %s13 = scalar_lea.sflag [#allocation3], 1
    %14 = vsyncpa %s13, 0
    %15 = vsyncpa [#allocation5], 0
    loop: start=0, step=1, limit=4
    $region2: #{vip_block_forward.3} parent=1 // loop_pre_header
      _
    $region3: #{vip_block_forward.3} parent=1 // loop_header
      %s17 = sphi 0, %s21
      %p18 = scmp.ge.s32.totalorder %s17, 4
      %s27 = sphi 0, %s29
      %s30 = sphi 0, %s27
      %s31 = sphi 0, %s30
      %s47 = sphi 0, %s31
      %s51 = sphi 0, %s51
      %s53 = sphi 0, %s51
      %s54 = sphi 0, %s53
      %s68 = sphi 0, %s54
      %s72 = sphi 0, %s72
      %s74 = sphi 0, %s72
      %s75 = sphi 0, %s74
      %s89 = sphi 0, %s75
      %s93 = sphi 0, %s93
      %s95 = sphi 0, %s93
      %s96 = sphi 0, %s95
      %s110 = sphi 0, %s96
      %s114 = sphi 0, %s114
      %s116 = sphi 0, %s114
      %s117 = sphi 0, %s116
      %s131 = sphi 0, %s117
      %s137 = sphi 0, %s139
      %s140 = sphi 0, %s137
      %s141 = sphi 0, %s140
      %s157 = sphi 0, %s141
      %s163 = sphi 0, %s165
      %s166 = sphi 0, %s163
      %s167 = sphi 0, %s166
      %s183 = sphi 0, %s167
    $region4: #{vip_block_forward.3} parent=1 // loop_header_branch
      %20 = sbr.rel (%p18) target = $region8
    $region5: #{vip_block_forward.3} parent=1 // loop_body
      %s22 = ssub.s32 %s17, 1
      %s23 = ssub.s32 %s17, 2
      %s24 = sadd.s32 %s17, 1
      %s25 = ssub.s32 %s17, %s24
      %p26 = scmp.eq.s32.totalorder %s25, 0
      %s28 = sadd.s32 %s27, 1
      %s29 = scalar_select %p26, %s27, %s28
      %p32 = pneg %p26
      %p33 = scmp.eq.s32.totalorder %s17, 1
      %p34 = por %p32, %p33
      %p35 = scmp.ne.s32.totalorder %s27, %s30
      %p36 = scmp.eq.s32.totalorder %s17, 0
      %p37 = por %p35, %p36
      %p38 = scmp.ne.s32.totalorder %s27, %s30
      %p39 = scmp.eq.s32.totalorder %s22, 1
      %p40 = por %p38, %p39
      %p41 = scmp.ne.s32.totalorder %s30, %s31
      %p42 = scmp.eq.s32.totalorder %s22, 0
      %p43 = por %p41, %p42
      %p44 = scmp.ne.s32.totalorder %s30, %s31
      %p45 = scmp.eq.s32.totalorder %s23, 1
      %p46 = por %p44, %p45
      %p48 = scmp.ne.s32.totalorder %s31, %s47
      %p49 = scmp.eq.s32.totalorder %s23, 0
      %p50 = por %p48, %p49
      %s52 = sadd.s32 %s51, 1
      %p55 = scmp.eq.s32.totalorder %s17, 1
      %p56 = scmp.ne.s32.totalorder %s51, %s53
      %p57 = scmp.eq.s32.totalorder %s17, 0
      %p58 = por %p56, %p57
      %p59 = scmp.ne.s32.totalorder %s51, %s53
      %p60 = scmp.eq.s32.totalorder %s22, 1
      %p61 = por %p59, %p60
      %p62 = scmp.ne.s32.totalorder %s53, %s54
      %p63 = scmp.eq.s32.totalorder %s22, 0
      %p64 = por %p62, %p63
      %p65 = scmp.ne.s32.totalorder %s53, %s54
      %p66 = scmp.eq.s32.totalorder %s23, 1
      %p67 = por %p65, %p66
      %p69 = scmp.ne.s32.totalorder %s54, %s68
      %p70 = scmp.eq.s32.totalorder %s23, 0
      %p71 = por %p69, %p70
      %s73 = sadd.s32 %s72, 1
      %p76 = scmp.eq.s32.totalorder %s17, 1
      %p77 = scmp.ne.s32.totalorder %s72, %s74
      %p78 = scmp.eq.s32.totalorder %s17, 0
      %p79 = por %p77, %p78
      %p80 = scmp.ne.s32.totalorder %s72, %s74
      %p81 = scmp.eq.s32.totalorder %s22, 1
      %p82 = por %p80, %p81
      %p83 = scmp.ne.s32.totalorder %s74, %s75
      %p84 = scmp.eq.s32.totalorder %s22, 0
      %p85 = por %p83, %p84
      %p86 = scmp.ne.s32.totalorder %s74, %s75
      %p87 = scmp.eq.s32.totalorder %s23, 1
      %p88 = por %p86, %p87
      %p90 = scmp.ne.s32.totalorder %s75, %s89
      %p91 = scmp.eq.s32.totalorder %s23, 0
      %p92 = por %p90, %p91
      %s94 = sadd.s32 %s93, 1
      %p97 = scmp.eq.s32.totalorder %s17, 1
      %p98 = scmp.ne.s32.totalorder %s93, %s95
      %p99 = scmp.eq.s32.totalorder %s17, 0
      %p100 = por %p98, %p99
      %p101 = scmp.ne.s32.totalorder %s93, %s95
      %p102 = scmp.eq.s32.totalorder %s22, 1
      %p103 = por %p101, %p102
      %p104 = scmp.ne.s32.totalorder %s95, %s96
      %p105 = scmp.eq.s32.totalorder %s22, 0
      %p106 = por %p104, %p105
      %p107 = scmp.ne.s32.totalorder %s95, %s96
      %p108 = scmp.eq.s32.totalorder %s23, 1
      %p109 = por %p107, %p108
      %p111 = scmp.ne.s32.totalorder %s96, %s110
      %p112 = scmp.eq.s32.totalorder %s23, 0
      %p113 = por %p111, %p112
      %s115 = sadd.s32 %s114, 1
      %p118 = scmp.eq.s32.totalorder %s17, 1
      %p119 = scmp.ne.s32.totalorder %s114, %s116
      %p120 = scmp.eq.s32.totalorder %s17, 0
      %p121 = por %p119, %p120
      %p122 = scmp.ne.s32.totalorder %s114, %s116
      %p123 = scmp.eq.s32.totalorder %s22, 1
      %p124 = por %p122, %p123
      %p125 = scmp.ne.s32.totalorder %s116, %s117
      %p126 = scmp.eq.s32.totalorder %s22, 0
      %p127 = por %p125, %p126
      %p128 = scmp.ne.s32.totalorder %s116, %s117
      %p129 = scmp.eq.s32.totalorder %s23, 1
      %p130 = por %p128, %p129
      %p132 = scmp.ne.s32.totalorder %s117, %s131
      %p133 = scmp.eq.s32.totalorder %s23, 0
      %p134 = por %p132, %p133
      %s135 = ssub.s32 %s17, %s24
      %p136 = scmp.eq.s32.totalorder %s135, 0
      %s138 = sadd.s32 %s137, 1
      %s139 = scalar_select %p136, %s137, %s138
      %p142 = pneg %p136
      %p143 = scmp.eq.s32.totalorder %s17, 1
      %p144 = por %p142, %p143
      %p145 = scmp.ne.s32.totalorder %s137, %s140
      %p146 = scmp.eq.s32.totalorder %s17, 0
      %p147 = por %p145, %p146
      %p148 = scmp.ne.s32.totalorder %s137, %s140
      %p149 = scmp.eq.s32.totalorder %s22, 1
      %p150 = por %p148, %p149
      %p151 = scmp.ne.s32.totalorder %s140, %s141
      %p152 = scmp.eq.s32.totalorder %s22, 0
      %p153 = por %p151, %p152
      %p154 = scmp.ne.s32.totalorder %s140, %s141
      %p155 = scmp.eq.s32.totalorder %s23, 1
      %p156 = por %p154, %p155
      %p158 = scmp.ne.s32.totalorder %s141, %s157
      %p159 = scmp.eq.s32.totalorder %s23, 0
      %p160 = por %p158, %p159
      %s161 = ssub.s32 %s17, %s24
      %p162 = scmp.eq.s32.totalorder %s161, 0
      %s164 = sadd.s32 %s163, 1
      %s165 = scalar_select %p162, %s163, %s164
      %p168 = pneg %p162
      %p169 = scmp.eq.s32.totalorder %s17, 1
      %p170 = por %p168, %p169
      %p171 = scmp.ne.s32.totalorder %s163, %s166
      %p172 = scmp.eq.s32.totalorder %s17, 0
      %p173 = por %p171, %p172
      %p174 = scmp.ne.s32.totalorder %s163, %s166
      %p175 = scmp.eq.s32.totalorder %s22, 1
      %p176 = por %p174, %p175
      %p177 = scmp.ne.s32.totalorder %s166, %s167
      %p178 = scmp.eq.s32.totalorder %s22, 0
      %p179 = por %p177, %p178
      %p180 = scmp.ne.s32.totalorder %s166, %s167
      %p181 = scmp.eq.s32.totalorder %s23, 1
      %p182 = por %p180, %p181
      %p184 = scmp.ne.s32.totalorder %s167, %s183
      %p185 = scmp.eq.s32.totalorder %s23, 0
      %p186 = por %p184, %p185
      %p187 = scmp.le.s32.totalorder 1, %s17
      %p188 = scmp.lt.s32.totalorder %s17, 3
      %p189 = pnand %p187, %p188
      %p190 = pneg %p189
      // Predicated region
      $region9: #{vip_block_forward.3} parent=5 // pred_check
        _
      $region10: #{vip_block_forward.3} parent=5 // pred_check_branch
        %192 = sbr.rel (%p189) target = $region12
      $region11: #{vip_block_forward.3} parent=5 // pred_region
        %s193 = ssub.s32 %s17, 1
        // Predicated region
        $region13: #{vip_block_forward.3} parent=11 // pred_check
          %p194 = pneg %p64
        $region14: #{vip_block_forward.3} parent=11 // pred_check_branch
          %196 = sbr.rel (%p194) target = $region16
        $region15: #{vip_block_forward.3} parent=11 // pred_region
          _
        $region16: #{vip_block_forward.3} parent=11 // pred_fallthru
          _
        // Predicated region
        $region17: #{vip_block_forward.3} parent=11 // pred_check
          %p197 = pneg %p85
        $region18: #{vip_block_forward.3} parent=11 // pred_check_branch
          %199 = sbr.rel (%p197) target = $region20
        $region19: #{vip_block_forward.3} parent=11 // pred_region
          _
        $region20: #{vip_block_forward.3} parent=11 // pred_fallthru
          _
        // Predicated region
        $region21: #{vip_block_forward.3} parent=11 // pred_check
          %p200 = pneg %p106
        $region22: #{vip_block_forward.3} parent=11 // pred_check_branch
          %202 = sbr.rel (%p200) target = $region24
        $region23: #{vip_block_forward.3} parent=11 // pred_region
          %s204 = ssub.s32 512, 512
          %205 = vsyncadd [#allocation5], %s204
          %s206 = sshll.u32 [#allocation4], 4
          %s207 = int_to_ptr.vmem [resolvable:$true] %s206
          %212 = dma.hbm_to_vmem [thread:$0]  %s3, 512, %s207, [#allocation5], 128, 128, 8
        $region24: #{vip_block_forward.3} parent=11 // pred_fallthru
          _
        // Predicated region
        $region25: #{vip_block_forward.3} parent=11 // pred_check
          %p213 = pneg %p127
        $region26: #{vip_block_forward.3} parent=11 // pred_check_branch
          %215 = sbr.rel (%p213) target = $region28
        $region27: #{vip_block_forward.3} parent=11 // pred_region
          _
        $region28: #{vip_block_forward.3} parent=11 // pred_fallthru
          _
      $region12: #{vip_block_forward.3} parent=5 // pred_fallthru
        _
      %p216 = scmp.lt.s32.totalorder %s17, 2
      // Predicated region
      $region29: #{vip_block_forward.3} parent=5 // pred_check
        %p217 = pneg %p216
      $region30: #{vip_block_forward.3} parent=5 // pred_check_branch
        %219 = sbr.rel (%p217) target = $region32
      $region31: #{vip_block_forward.3} parent=5 // pred_region
        // Predicated region
        $region33: #{vip_block_forward.3} parent=31 // pred_check
          %p220 = pneg %p37
        $region34: #{vip_block_forward.3} parent=31 // pred_check_branch
          %222 = sbr.rel (%p220) target = $region36
        $region35: #{vip_block_forward.3} parent=31 // pred_region
          %s223 = sand.u32 %s27, 1
          %s224 = scalar_lea.sflag [#allocation3], %s223
          %s225 = sand.u32 %s27, 1
          %s226 = smul.addr %s225, 64
          %s227 = scalar_lea.vmem [#allocation2], %s226
          %s228 = smul.u32 8, %s17
          %s230 = ssub.s32 1024, 1024
          %231 = vsyncadd %s224, %s230
          %s232 = smul.addr %s228, 128
          %s233 = scalar_lea.hbm %s0, %s232
          %s234 = sshll.u32 %s227, 4
          %s235 = int_to_ptr.vmem [resolvable:$true] %s234
          %240 = dma.hbm_to_vmem [thread:$0]  %s233, 1024, %s235, %s224, 128, 128, 8
        $region36: #{vip_block_forward.3} parent=31 // pred_fallthru
          _
      $region32: #{vip_block_forward.3} parent=5 // pred_fallthru
        _
      %p241 = scmp.le.s32.totalorder 1, %s17
      %p242 = scmp.lt.s32.totalorder %s17, 3
      %p243 = pnand %p241, %p242
      %p244 = pneg %p243
      // Predicated region
      $region37: #{vip_block_forward.3} parent=5 // pred_check
        _
      $region38: #{vip_block_forward.3} parent=5 // pred_check_branch
        %246 = sbr.rel (%p243) target = $region40
      $region39: #{vip_block_forward.3} parent=5 // pred_region
        %s247 = ssub.s32 %s17, 1
        %s248 = sand.u32 %s30, 1
        %s249 = scalar_lea.sflag [#allocation3], %s248
        %s250 = sand.u32 %s30, 1
        %s251 = smul.addr %s250, 64
        %s252 = scalar_lea.vmem [#allocation2], %s251
        // Predicated region
        $region41: #{vip_block_forward.3} parent=39 // pred_check
          %p253 = pneg %p43
        $region42: #{vip_block_forward.3} parent=39 // pred_check_branch
          %255 = sbr.rel (%p253) target = $region44
        $region43: #{vip_block_forward.3} parent=39 // pred_region
          %256 = dma.done %s249, 1024
        $region44: #{vip_block_forward.3} parent=39 // pred_fallthru
          _
        // Predicated region
        $region45: #{vip_block_forward.3} parent=39 // pred_check
          %p257 = pneg %p106
        $region46: #{vip_block_forward.3} parent=39 // pred_check_branch
          %259 = sbr.rel (%p257) target = $region48
        $region47: #{vip_block_forward.3} parent=39 // pred_region
          %260 = dma.done [#allocation5], 512
        $region48: #{vip_block_forward.3} parent=39 // pred_fallthru
          _
        %s261 = sand.u32 %s30, 1
        %s262 = scalar_lea.sflag [#allocation3], %s261
        %s263 = sand.u32 %s30, 1
        %s264 = smul.addr %s263, 64
        %s265 = scalar_lea.vmem [#allocation2], %s264
        %p266 = pneg %p43
        %p267 = pneg %p40
        %p268 = pneg %p64
        %p269 = pneg %p61
        %p270 = pneg %p85
        %p271 = pneg %p82
        %p272 = pneg %p106
        %p273 = pneg %p103
        %p274 = pneg %p127
        %p275 = pneg %p124
        %p276 = pneg %p153
        %p277 = pneg %p150
        %s278 = smul.u32 8, %s22
        %p279 = scmp.lt.s32.totalorder %s278, 15
        %s280 = scalar_select %p279, %s278, 15
        %s281 = smul.addr %s280, 8
        %s282 = scalar_lea.vmem %s5, %s281
        %p283 = pneg %p179
        %p284 = pneg %p176
        %s285 = smul.u32 8, %s22
        %p286 = scmp.lt.s32.totalorder %s285, 15
        %s287 = scalar_select %p286, %s285, 15
        %s288 = smul.addr %s287, 8
        %s289 = scalar_lea.vmem %s6, %s288
        %s290 = smul.u32 8, %s22
        %s291 = smul.u32 8, %s22
        %p292 = scmp.lt.s32.totalorder %s291, 15
        %s293 = scalar_select %p292, %s291, 15
        %s294 = smul.addr %s293, 8
        %s295 = scalar_lea.vmem %s5, %s294
        %s296 = smul.u32 8, %s22
        %s297 = smul.u32 8, %s22
        %p298 = scmp.lt.s32.totalorder %s297, 15
        %s299 = scalar_select %p298, %s297, 15
        %s300 = smul.addr %s299, 8
        %s301 = scalar_lea.vmem %s6, %s300
        %s302 = smul.u32 8, %s22
        %v304 = vld [vmem:[%s252] sm:$0xff]
        %v305 = vld [vmem:[%s252 + $0x8] sm:$0xff]
        %v306 = vld [vmem:[%s252 + $0x10] sm:$0xff]
        %v307 = vld [vmem:[%s252 + $0x18] sm:$0xff]
        %v308 = vld [vmem:[%s252 + $0x20] sm:$0xff]
        %v309 = vld [vmem:[%s252 + $0x28] sm:$0xff]
        %v310 = vld [vmem:[%s252 + $0x30] sm:$0xff]
        %v311 = vld [vmem:[%s252 + $0x38] sm:$0xff]
        %vm312 = vcmask 261120
        %v313 = vsel %vm312, %v304, 0.0
        %314 = vadd.xlane.f32.xlu0 %v313
        %v315 = vpop.xlane.xlu0 %314
        %v316 = vsel %vm312, %v305, 0.0
        %317 = vadd.xlane.f32.xlu0 %v316
        %v318 = vpop.xlane.xlu0 %317
        %v319 = vsel %vm312, %v306, 0.0
        %320 = vadd.xlane.f32.xlu0 %v319
        %v321 = vpop.xlane.xlu0 %320
        %v322 = vsel %vm312, %v307, 0.0
        %323 = vadd.xlane.f32.xlu0 %v322
        %v324 = vpop.xlane.xlu0 %323
        %v325 = vsel %vm312, %v308, 0.0
        %326 = vadd.xlane.f32.xlu0 %v325
        %v327 = vpop.xlane.xlu0 %326
        %v328 = vsel %vm312, %v309, 0.0
        %329 = vadd.xlane.f32.xlu0 %v328
        %v330 = vpop.xlane.xlu0 %329
        %v331 = vsel %vm312, %v310, 0.0
        %332 = vadd.xlane.f32.xlu0 %v331
        %v333 = vpop.xlane.xlu0 %332
        %v334 = vsel %vm312, %v311, 0.0
        %335 = vadd.xlane.f32.xlu0 %v334
        %v336 = vpop.xlane.xlu0 %335
        %v337 = vrcp.pop 32.0
        %v338 = vmul.f32 %v315, %v337
        %v339 = vmul.f32 %v318, %v337
        %v340 = vmul.f32 %v321, %v337
        %v341 = vmul.f32 %v324, %v337
        %v342 = vmul.f32 %v327, %v337
        %v343 = vmul.f32 %v330, %v337
        %v344 = vmul.f32 %v333, %v337
        %v345 = vmul.f32 %v336, %v337
        %v346 = vsub.f32 %v304, %v338
        %v347 = vsub.f32 %v305, %v339
        %v348 = vsub.f32 %v306, %v340
        %v349 = vsub.f32 %v307, %v341
        %v350 = vsub.f32 %v308, %v342
        %v351 = vsub.f32 %v309, %v343
        %v352 = vsub.f32 %v310, %v344
        %v353 = vsub.f32 %v311, %v345
        %v354 = vmul.f32 %v346, %v346
        %v355 = vmul.f32 %v347, %v347
        %v356 = vmul.f32 %v348, %v348
        %v357 = vmul.f32 %v349, %v349
        %v358 = vmul.f32 %v350, %v350
        %v359 = vmul.f32 %v351, %v351
        %v360 = vmul.f32 %v352, %v352
        %v361 = vmul.f32 %v353, %v353
        %v362 = vsel %vm312, %v354, 0.0
        %363 = vadd.xlane.f32.xlu0 %v362
        %v364 = vpop.xlane.xlu0 %363
        %v365 = vsel %vm312, %v355, 0.0
        %366 = vadd.xlane.f32.xlu0 %v365
        %v367 = vpop.xlane.xlu0 %366
        %v368 = vsel %vm312, %v356, 0.0
        %369 = vadd.xlane.f32.xlu0 %v368
        %v370 = vpop.xlane.xlu0 %369
        %v371 = vsel %vm312, %v357, 0.0
        %372 = vadd.xlane.f32.xlu0 %v371
        %v373 = vpop.xlane.xlu0 %372
        %v374 = vsel %vm312, %v358, 0.0
        %375 = vadd.xlane.f32.xlu0 %v374
        %v376 = vpop.xlane.xlu0 %375
        %v377 = vsel %vm312, %v359, 0.0
        %378 = vadd.xlane.f32.xlu0 %v377
        %v379 = vpop.xlane.xlu0 %378
        %v380 = vsel %vm312, %v360, 0.0
        %381 = vadd.xlane.f32.xlu0 %v380
        %v382 = vpop.xlane.xlu0 %381
        %v383 = vsel %vm312, %v361, 0.0
        %384 = vadd.xlane.f32.xlu0 %v383
        %v385 = vpop.xlane.xlu0 %384
        %v386 = vmul.f32 %v364, %v337
        %v387 = vmul.f32 %v367, %v337
        %v388 = vmul.f32 %v370, %v337
        %v389 = vmul.f32 %v373, %v337
        %v390 = vmul.f32 %v376, %v337
        %v391 = vmul.f32 %v379, %v337
        %v392 = vmul.f32 %v382, %v337
        %v393 = vmul.f32 %v385, %v337
        %v394 = vadd.f32 %v386, 1e-05
        %v395 = vadd.f32 %v387, 1e-05
        %v396 = vadd.f32 %v388, 1e-05
        %v397 = vadd.f32 %v389, 1e-05
        %v398 = vadd.f32 %v390, 1e-05
        %v399 = vadd.f32 %v391, 1e-05
        %v400 = vadd.f32 %v392, 1e-05
        %v401 = vadd.f32 %v393, 1e-05
        %v402 = vrsqrt.pop %v394
        %v403 = vrsqrt.pop %v395
        %v404 = vrsqrt.pop %v396
        %v405 = vrsqrt.pop %v397
        %v406 = vrsqrt.pop %v398
        %v407 = vrsqrt.pop %v399
        %v408 = vrsqrt.pop %v400
        %v409 = vrsqrt.pop %v401
        %v410 = vmul.f32 %v346, %v402
        %v411 = vmul.f32 %v347, %v403
        %v412 = vmul.f32 %v348, %v404
        %v413 = vmul.f32 %v349, %v405
        %v414 = vmul.f32 %v350, %v406
        %v415 = vmul.f32 %v351, %v407
        %v416 = vmul.f32 %v352, %v408
        %v417 = vmul.f32 %v353, %v409
        %v418 = vld [vmem:[%s1] sm:$0x1]
        %v420 = vlaneseq
        %v421 = vshrl.u32 %v420, 7
        %v422 = vsub.s32 0, %v421
        %v423 = vrot.slane %v418, %v422
        %v425 = vmul.f32 %v410, %v423
        %v426 = vmul.f32 %v411, %v423
        %v427 = vmul.f32 %v412, %v423
        %v428 = vmul.f32 %v413, %v423
        %v429 = vmul.f32 %v414, %v423
        %v430 = vmul.f32 %v415, %v423
        %v431 = vmul.f32 %v416, %v423
        %v432 = vmul.f32 %v417, %v423
        %v433 = vld [vmem:[%s2] sm:$0x1]
        %v435 = vlaneseq
        %v436 = vshrl.u32 %v435, 7
        %v437 = vsub.s32 0, %v436
        %v438 = vrot.slane %v433, %v437
        %v440 = vadd.f32 %v425, %v438
        %v441 = vadd.f32 %v426, %v438
        %v442 = vadd.f32 %v427, %v438
        %v443 = vadd.f32 %v428, %v438
        %v444 = vadd.f32 %v429, %v438
        %v445 = vadd.f32 %v430, %v438
        %v446 = vadd.f32 %v431, %v438
        %v447 = vadd.f32 %v432, %v438
        %448 = vst.msk [vmem:[%s295] sm:$0xff] %vm312, %v440
        %449 = vst.msk [vmem:[%s295 + $0x8] sm:$0xff] %vm312, %v441
        %450 = vst.msk [vmem:[%s295 + $0x10] sm:$0xff] %vm312, %v442
        %451 = vst.msk [vmem:[%s295 + $0x18] sm:$0xff] %vm312, %v443
        %452 = vst.msk [vmem:[%s295 + $0x20] sm:$0xff] %vm312, %v444
        %453 = vst.msk [vmem:[%s295 + $0x28] sm:$0xff] %vm312, %v445
        %454 = vst.msk [vmem:[%s295 + $0x30] sm:$0xff] %vm312, %v446
        %455 = vst.msk [vmem:[%s295 + $0x38] sm:$0xff] %vm312, %v447
        %v456 = vpack.c.bf16 %v441, %v440
        %v457 = vpack.c.bf16 %v443, %v442
        %v458 = vpack.c.bf16 %v445, %v444
        %v459 = vpack.c.bf16 %v447, %v446
        %v460 = vld [vmem:[#allocation4] sm:$0xff]
        %v461 = vld [vmem:[#allocation4 + $0x8] sm:$0xff]
        %v462 = vld [vmem:[#allocation4 + $0x10] sm:$0xff]
        %v463 = vld [vmem:[#allocation4 + $0x18] sm:$0xff]
        %v464 = vpack.c.bf16 %v461, %v460
        %v465 = vpack.c.bf16 %v463, %v462
        %v466 = vld [vmem:[%s4] sm:$0x1]
        %v468 = vlaneseq
        %v469 = vshrl.u32 %v468, 7
        %v470 = vsub.s32 0, %v469
        %v471 = vrot.slane %v466, %v470
        %v474 = vsel %vm312, %v456, 0
        %v477 = vsel %vm312, %v457, 0
        %v480 = vsel %vm312, %v458, 0
        %v483 = vsel %vm312, %v459, 0
        %485 = vmatprep.subr.bf16.mxu0 0
        %486 = vmatpush1.bf16.msra.mxu0 0
        %487 = vmatprep.subr.bf16.mxu0 0
        %488 = vmatpush1.bf16.msra.mxu0 0
        %489 = vmatprep.subr.bf16.mxu0 0
        %490 = vmatpush1.bf16.msra.mxu0 0
        %491 = vmatprep.subr.bf16.mxu0 0
        %492 = vmatpush1.bf16.msra.mxu0 0
        %493 = vmatprep.subr.bf16.mxu0 0
        %494 = vmatpush1.bf16.msra.mxu0 0
        %495 = vmatprep.subr.bf16.mxu0 0
        %496 = vmatpush1.bf16.msra.mxu0 0
        %497 = vmatprep.subr.bf16.mxu0 0
        %498 = vmatpush1.bf16.msra.mxu0 %v465
        %499 = vmatprep.subr.bf16.mxu0 0
        %500 = vmatpush1.bf16.msra.mxu0 %v464
        %501 = vmatprep.subr.bf16.mxu0 0
        %502 = vmatpush2.bf16.msra.mxu0 0
        %503 = vmatprep.subr.bf16.mxu0 0
        %504 = vmatpush2.bf16.msra.mxu0 0
        %505 = vmatprep.subr.bf16.mxu0 0
        %506 = vmatpush2.bf16.msra.mxu0 0
        %507 = vmatprep.subr.bf16.mxu0 0
        %508 = vmatpush2.bf16.msra.mxu0 0
        %509 = vmatprep.subr.bf16.mxu0 0
        %510 = vmatpush2.bf16.msra.mxu0 0
        %511 = vmatprep.subr.bf16.mxu0 0
        %512 = vmatpush2.bf16.msra.mxu0 0
        %513 = vmatprep.subr.bf16.mxu0 0
        %514 = vmatpush2.bf16.msra.mxu0 0
        %515 = vmatprep.subr.bf16.mxu0 0
        %516 = vmatpush2.bf16.msra.mxu0 0
        %517 = vmatprep.mubr.bf16.mxu0 0
        %518 = vmatmul.mubr.bf16.gmra.mxu0 %v474
        %v519 = vpop.f32.mrf.mxu0
        %v520 = vadd.f32 %v471, %v519
        %v521 = vpop.f32.mrf.mxu0
        %v522 = vpop.f32.mrf.mxu0
        %v523 = vadd.f32 %v471, %v522
        %v524 = vpop.f32.mrf.mxu0
        %525 = vmatprep.mubr.bf16.mxu0 0
        %526 = vmatmul.mubr.bf16.gmra.mxu0 %v477
        %v527 = vpop.f32.mrf.mxu0
        %v528 = vadd.f32 %v471, %v527
        %v529 = vpop.f32.mrf.mxu0
        %v530 = vpop.f32.mrf.mxu0
        %v531 = vadd.f32 %v471, %v530
        %v532 = vpop.f32.mrf.mxu0
        %533 = vmatprep.mubr.bf16.mxu0 0
        %534 = vmatmul.mubr.bf16.gmra.mxu0 %v480
        %v535 = vpop.f32.mrf.mxu0
        %v536 = vadd.f32 %v471, %v535
        %v537 = vpop.f32.mrf.mxu0
        %v538 = vpop.f32.mrf.mxu0
        %v539 = vadd.f32 %v471, %v538
        %v540 = vpop.f32.mrf.mxu0
        %541 = vmatprep.mubr.bf16.mxu0 0
        %542 = vmatmul.mubr.bf16.gmra.mxu0 %v483
        %v543 = vpop.f32.mrf.mxu0
        %v544 = vadd.f32 %v471, %v543
        %v545 = vpop.f32.mrf.mxu0
        %v546 = vpop.f32.mrf.mxu0
        %v547 = vadd.f32 %v471, %v546
        %v548 = vpop.f32.mrf.mxu0
        %549 = vdwg.mxu0
        %550 = vst.msk [vmem:[%s301] sm:$0xff] %vm312, %v520
        %551 = vst.msk [vmem:[%s301 + $0x8] sm:$0xff] %vm312, %v523
        %552 = vst.msk [vmem:[%s301 + $0x10] sm:$0xff] %vm312, %v528
        %553 = vst.msk [vmem:[%s301 + $0x18] sm:$0xff] %vm312, %v531
        %554 = vst.msk [vmem:[%s301 + $0x20] sm:$0xff] %vm312, %v536
        %555 = vst.msk [vmem:[%s301 + $0x28] sm:$0xff] %vm312, %v539
        %556 = vst.msk [vmem:[%s301 + $0x30] sm:$0xff] %vm312, %v544
        %557 = vst.msk [vmem:[%s301 + $0x38] sm:$0xff] %vm312, %v547
        %s558 = smul.u32 8, %s22
        %p559 = scmp.lt.s32.totalorder %s558, 15
        %s560 = scalar_select %p559, %s558, 15
        %s561 = smul.addr %s560, 8
        %s562 = scalar_lea.vmem %s5, %s561
        %s563 = smul.u32 8, %s22
        %p564 = scmp.lt.s32.totalorder %s563, 15
        %s565 = scalar_select %p564, %s563, 15
        %s566 = smul.addr %s565, 8
        %s567 = scalar_lea.vmem %s6, %s566
        // Predicated region
        $region49: #{vip_block_forward.3} parent=39 // pred_check
          %p568 = pneg %p150
        $region50: #{vip_block_forward.3} parent=39 // pred_check_branch
          %570 = sbr.rel (%p568) target = $region52
        $region51: #{vip_block_forward.3} parent=39 // pred_region
          %s571 = smul.u32 8, %s22
        $region52: #{vip_block_forward.3} parent=39 // pred_fallthru
          _
        // Predicated region
        $region53: #{vip_block_forward.3} parent=39 // pred_check
          %p572 = pneg %p176
        $region54: #{vip_block_forward.3} parent=39 // pred_check_branch
          %574 = sbr.rel (%p572) target = $region56
        $region55: #{vip_block_forward.3} parent=39 // pred_region
          %s575 = smul.u32 8, %s22
        $region56: #{vip_block_forward.3} parent=39 // pred_fallthru
          _
      $region40: #{vip_block_forward.3} parent=5 // pred_fallthru
        _
      %p576 = scmp.le.s32.totalorder 2, %s17
      // Predicated region
      $region57: #{vip_block_forward.3} parent=5 // pred_check
        %p577 = pneg %p576
      $region58: #{vip_block_forward.3} parent=5 // pred_check_branch
        %579 = sbr.rel (%p577) target = $region60
      $region59: #{vip_block_forward.3} parent=5 // pred_region
        %s580 = ssub.s32 %s17, 2
        // Predicated region
        $region61: #{vip_block_forward.3} parent=59 // pred_check
          %p581 = pneg %p156
        $region62: #{vip_block_forward.3} parent=59 // pred_check_branch
          %583 = sbr.rel (%p581) target = $region64
        $region63: #{vip_block_forward.3} parent=59 // pred_region
          %s584 = smul.u32 8, %s23
          %p585 = scmp.lt.s32.totalorder %s584, 15
          %s586 = scalar_select %p585, %s584, 15
          %s587 = smul.addr %s586, 8
          %s588 = scalar_lea.vmem %s5, %s587
        $region64: #{vip_block_forward.3} parent=59 // pred_fallthru
          _
        // Predicated region
        $region65: #{vip_block_forward.3} parent=59 // pred_check
          %p589 = pneg %p182
        $region66: #{vip_block_forward.3} parent=59 // pred_check_branch
          %591 = sbr.rel (%p589) target = $region68
        $region67: #{vip_block_forward.3} parent=59 // pred_region
          %s592 = smul.u32 8, %s23
          %p593 = scmp.lt.s32.totalorder %s592, 15
          %s594 = scalar_select %p593, %s592, 15
          %s595 = smul.addr %s594, 8
          %s596 = scalar_lea.vmem %s6, %s595
        $region68: #{vip_block_forward.3} parent=59 // pred_fallthru
          _
      $region60: #{vip_block_forward.3} parent=5 // pred_fallthru
        _
    $region6: #{vip_block_forward.3} parent=1 // loop_footer
      %s21 = sadd.s32 1, %s17
    $region7: #{vip_block_forward.3} parent=1 // loop_footer_branch
      %16 = sbr.rel target = $region3
    $region8: #{vip_block_forward.3} parent=1 // loop_exit
      _
    %597 = vsyncpa [#allocation3], 1
    %s598 = scalar_lea.sflag [#allocation3], 1
    %599 = vsyncpa %s598, 1
    %600 = vsyncpa [#allocation5], 1

// kernel: vip_block_forward.4
$region0: #{vip_block_forward.4}
  #allocation0 [shape = 'u32[]', space=smem, size = 0x4, offset = 0x4, fixed_abs, tag = 'smem constant byte address 0x4 - core index']
  #allocation1 [shape = 'u32[144,128]{1,0:T(1,128)}', space=vmem, size = 0x12000, scoped, tag = 'internal scratch']
  %s0 = inlined_call_operand.vmem [shape: f32[128,32], index: 0, kind: input, shape index: {}]
  %s1 = inlined_call_operand.vmem [shape: f32[128,32], index: 1, kind: input, shape index: {}]
  %s2 = inlined_call_operand.vmem [shape: f32[32,32], index: 2, kind: input, shape index: {}]
  %s3 = inlined_call_operand.vmem [shape: f32[1,32], index: 3, kind: input, shape index: {}]
  %s4 = inlined_call_operand.vmem [shape: f32[128,32], index: 4, kind: output, shape index: {0}]
  %s5 = inlined_call_operand.vmem [shape: f32[128,32], index: 5, kind: output, shape index: {1}]
  %6 = xla_tuple %s4, %s5
  %s7 = sld [smem:[#allocation0]]
  $region57: #{vip_block_forward.4} parent=0
    _
  %s9 = ssub.s32 1, %s7
  %s10 = scalar_select 0, %s9, %s7
  loop: start=0, step=1, limit=4
  $region2: #{vip_block_forward.4} parent=0 // loop_pre_header
    _
  $region3: #{vip_block_forward.4} parent=0 // loop_header
    %s12 = sphi 0, %s16
    %p13 = scmp.ge.s32.totalorder %s12, 4
    %s22 = sphi 0, %s24
    %s25 = sphi 0, %s22
    %s26 = sphi 0, %s25
    %s42 = sphi 0, %s26
    %s48 = sphi 0, %s50
    %s51 = sphi 0, %s48
    %s52 = sphi 0, %s51
    %s68 = sphi 0, %s52
    %s72 = sphi 0, %s72
    %s74 = sphi 0, %s72
    %s75 = sphi 0, %s74
    %s89 = sphi 0, %s75
    %s93 = sphi 0, %s93
    %s95 = sphi 0, %s93
    %s96 = sphi 0, %s95
    %s110 = sphi 0, %s96
    %s116 = sphi 0, %s118
    %s119 = sphi 0, %s116
    %s120 = sphi 0, %s119
    %s136 = sphi 0, %s120
    %s142 = sphi 0, %s144
    %s145 = sphi 0, %s142
    %s146 = sphi 0, %s145
    %s162 = sphi 0, %s146
  $region4: #{vip_block_forward.4} parent=0 // loop_header_branch
    %15 = sbr.rel (%p13) target = $region8
  $region5: #{vip_block_forward.4} parent=0 // loop_body
    %s17 = ssub.s32 %s12, 1
    %s18 = ssub.s32 %s12, 2
    %s19 = sadd.s32 %s12, 1
    %s20 = ssub.s32 %s12, %s19
    %p21 = scmp.eq.s32.totalorder %s20, 0
    %s23 = sadd.s32 %s22, 1
    %s24 = scalar_select %p21, %s22, %s23
    %p27 = pneg %p21
    %p28 = scmp.eq.s32.totalorder %s12, 1
    %p29 = por %p27, %p28
    %p30 = scmp.ne.s32.totalorder %s22, %s25
    %p31 = scmp.eq.s32.totalorder %s12, 0
    %p32 = por %p30, %p31
    %p33 = scmp.ne.s32.totalorder %s22, %s25
    %p34 = scmp.eq.s32.totalorder %s17, 1
    %p35 = por %p33, %p34
    %p36 = scmp.ne.s32.totalorder %s25, %s26
    %p37 = scmp.eq.s32.totalorder %s17, 0
    %p38 = por %p36, %p37
    %p39 = scmp.ne.s32.totalorder %s25, %s26
    %p40 = scmp.eq.s32.totalorder %s18, 1
    %p41 = por %p39, %p40
    %p43 = scmp.ne.s32.totalorder %s26, %s42
    %p44 = scmp.eq.s32.totalorder %s18, 0
    %p45 = por %p43, %p44
    %s46 = ssub.s32 %s12, %s19
    %p47 = scmp.eq.s32.totalorder %s46, 0
    %s49 = sadd.s32 %s48, 1
    %s50 = scalar_select %p47, %s48, %s49
    %p53 = pneg %p47
    %p54 = scmp.eq.s32.totalorder %s12, 1
    %p55 = por %p53, %p54
    %p56 = scmp.ne.s32.totalorder %s48, %s51
    %p57 = scmp.eq.s32.totalorder %s12, 0
    %p58 = por %p56, %p57
    %p59 = scmp.ne.s32.totalorder %s48, %s51
    %p60 = scmp.eq.s32.totalorder %s17, 1
    %p61 = por %p59, %p60
    %p62 = scmp.ne.s32.totalorder %s51, %s52
    %p63 = scmp.eq.s32.totalorder %s17, 0
    %p64 = por %p62, %p63
    %p65 = scmp.ne.s32.totalorder %s51, %s52
    %p66 = scmp.eq.s32.totalorder %s18, 1
    %p67 = por %p65, %p66
    %p69 = scmp.ne.s32.totalorder %s52, %s68
    %p70 = scmp.eq.s32.totalorder %s18, 0
    %p71 = por %p69, %p70
    %s73 = sadd.s32 %s72, 1
    %p76 = scmp.eq.s32.totalorder %s12, 1
    %p77 = scmp.ne.s32.totalorder %s72, %s74
    %p78 = scmp.eq.s32.totalorder %s12, 0
    %p79 = por %p77, %p78
    %p80 = scmp.ne.s32.totalorder %s72, %s74
    %p81 = scmp.eq.s32.totalorder %s17, 1
    %p82 = por %p80, %p81
    %p83 = scmp.ne.s32.totalorder %s74, %s75
    %p84 = scmp.eq.s32.totalorder %s17, 0
    %p85 = por %p83, %p84
    %p86 = scmp.ne.s32.totalorder %s74, %s75
    %p87 = scmp.eq.s32.totalorder %s18, 1
    %p88 = por %p86, %p87
    %p90 = scmp.ne.s32.totalorder %s75, %s89
    %p91 = scmp.eq.s32.totalorder %s18, 0
    %p92 = por %p90, %p91
    %s94 = sadd.s32 %s93, 1
    %p97 = scmp.eq.s32.totalorder %s12, 1
    %p98 = scmp.ne.s32.totalorder %s93, %s95
    %p99 = scmp.eq.s32.totalorder %s12, 0
    %p100 = por %p98, %p99
    %p101 = scmp.ne.s32.totalorder %s93, %s95
    %p102 = scmp.eq.s32.totalorder %s17, 1
    %p103 = por %p101, %p102
    %p104 = scmp.ne.s32.totalorder %s95, %s96
    %p105 = scmp.eq.s32.totalorder %s17, 0
    %p106 = por %p104, %p105
    %p107 = scmp.ne.s32.totalorder %s95, %s96
    %p108 = scmp.eq.s32.totalorder %s18, 1
    %p109 = por %p107, %p108
    %p111 = scmp.ne.s32.totalorder %s96, %s110
    %p112 = scmp.eq.s32.totalorder %s18, 0
    %p113 = por %p111, %p112
    %s114 = ssub.s32 %s12, %s19
    %p115 = scmp.eq.s32.totalorder %s114, 0
    %s117 = sadd.s32 %s116, 1
    %s118 = scalar_select %p115, %s116, %s117
    %p121 = pneg %p115
    %p122 = scmp.eq.s32.totalorder %s12, 1
    %p123 = por %p121, %p122
    %p124 = scmp.ne.s32.totalorder %s116, %s119
    %p125 = scmp.eq.s32.totalorder %s12, 0
    %p126 = por %p124, %p125
    %p127 = scmp.ne.s32.totalorder %s116, %s119
    %p128 = scmp.eq.s32.totalorder %s17, 1
    %p129 = por %p127, %p128
    %p130 = scmp.ne.s32.totalorder %s119, %s120
    %p131 = scmp.eq.s32.totalorder %s17, 0
    %p132 = por %p130, %p131
    %p133 = scmp.ne.s32.totalorder %s119, %s120
    %p134 = scmp.eq.s32.totalorder %s18, 1
    %p135 = por %p133, %p134
    %p137 = scmp.ne.s32.totalorder %s120, %s136
    %p138 = scmp.eq.s32.totalorder %s18, 0
    %p139 = por %p137, %p138
    %s140 = ssub.s32 %s12, %s19
    %p141 = scmp.eq.s32.totalorder %s140, 0
    %s143 = sadd.s32 %s142, 1
    %s144 = scalar_select %p141, %s142, %s143
    %p147 = pneg %p141
    %p148 = scmp.eq.s32.totalorder %s12, 1
    %p149 = por %p147, %p148
    %p150 = scmp.ne.s32.totalorder %s142, %s145
    %p151 = scmp.eq.s32.totalorder %s12, 0
    %p152 = por %p150, %p151
    %p153 = scmp.ne.s32.totalorder %s142, %s145
    %p154 = scmp.eq.s32.totalorder %s17, 1
    %p155 = por %p153, %p154
    %p156 = scmp.ne.s32.totalorder %s145, %s146
    %p157 = scmp.eq.s32.totalorder %s17, 0
    %p158 = por %p156, %p157
    %p159 = scmp.ne.s32.totalorder %s145, %s146
    %p160 = scmp.eq.s32.totalorder %s18, 1
    %p161 = por %p159, %p160
    %p163 = scmp.ne.s32.totalorder %s146, %s162
    %p164 = scmp.eq.s32.totalorder %s18, 0
    %p165 = por %p163, %p164
    %p166 = scmp.le.s32.totalorder 1, %s12
    %p167 = scmp.lt.s32.totalorder %s12, 3
    %p168 = pnand %p166, %p167
    %p169 = pneg %p168
    // Predicated region
    $region9: #{vip_block_forward.4} parent=5 // pred_check
      _
    $region10: #{vip_block_forward.4} parent=5 // pred_check_branch
      %171 = sbr.rel (%p168) target = $region12
    $region11: #{vip_block_forward.4} parent=5 // pred_region
      %s172 = ssub.s32 %s12, 1
      // Predicated region
      $region13: #{vip_block_forward.4} parent=11 // pred_check
        %p173 = pneg %p85
      $region14: #{vip_block_forward.4} parent=11 // pred_check_branch
        %175 = sbr.rel (%p173) target = $region16
      $region15: #{vip_block_forward.4} parent=11 // pred_region
        _
      $region16: #{vip_block_forward.4} parent=11 // pred_fallthru
        _
      // Predicated region
      $region17: #{vip_block_forward.4} parent=11 // pred_check
        %p176 = pneg %p106
      $region18: #{vip_block_forward.4} parent=11 // pred_check_branch
        %178 = sbr.rel (%p176) target = $region20
      $region19: #{vip_block_forward.4} parent=11 // pred_region
        _
      $region20: #{vip_block_forward.4} parent=11 // pred_fallthru
        _
    $region12: #{vip_block_forward.4} parent=5 // pred_fallthru
      _
    %p179 = scmp.lt.s32.totalorder %s12, 2
    // Predicated region
    $region21: #{vip_block_forward.4} parent=5 // pred_check
      %p180 = pneg %p179
    $region22: #{vip_block_forward.4} parent=5 // pred_check_branch
      %182 = sbr.rel (%p180) target = $region24
    $region23: #{vip_block_forward.4} parent=5 // pred_region
      // Predicated region
      $region25: #{vip_block_forward.4} parent=23 // pred_check
        %p183 = pneg %p32
      $region26: #{vip_block_forward.4} parent=23 // pred_check_branch
        %185 = sbr.rel (%p183) target = $region28
      $region27: #{vip_block_forward.4} parent=23 // pred_region
        %s186 = smul.u32 8, %s12
        %p187 = scmp.lt.s32.totalorder %s186, 15
        %s188 = scalar_select %p187, %s186, 15
        %s189 = smul.addr %s188, 8
        %s190 = scalar_lea.vmem %s0, %s189
        %s191 = smul.u32 8, %s12
      $region28: #{vip_block_forward.4} parent=23 // pred_fallthru
        _
      // Predicated region
      $region29: #{vip_block_forward.4} parent=23 // pred_check
        %p192 = pneg %p58
      $region30: #{vip_block_forward.4} parent=23 // pred_check_branch
        %194 = sbr.rel (%p192) target = $region32
      $region31: #{vip_block_forward.4} parent=23 // pred_region
        %s195 = smul.u32 8, %s12
        %p196 = scmp.lt.s32.totalorder %s195, 15
        %s197 = scalar_select %p196, %s195, 15
        %s198 = smul.addr %s197, 8
        %s199 = scalar_lea.vmem %s1, %s198
        %s200 = smul.u32 8, %s12
      $region32: #{vip_block_forward.4} parent=23 // pred_fallthru
        _
    $region24: #{vip_block_forward.4} parent=5 // pred_fallthru
      _
    %p201 = scmp.le.s32.totalorder 1, %s12
    %p202 = scmp.lt.s32.totalorder %s12, 3
    %p203 = pnand %p201, %p202
    %p204 = pneg %p203
    // Predicated region
    $region33: #{vip_block_forward.4} parent=5 // pred_check
      _
    $region34: #{vip_block_forward.4} parent=5 // pred_check_branch
      %206 = sbr.rel (%p203) target = $region36
    $region35: #{vip_block_forward.4} parent=5 // pred_region
      %s207 = ssub.s32 %s12, 1
      %s208 = smul.u32 8, %s17
      %p209 = scmp.lt.s32.totalorder %s208, 15
      %s210 = scalar_select %p209, %s208, 15
      %s211 = smul.addr %s210, 8
      %s212 = scalar_lea.vmem %s0, %s211
      %p213 = pneg %p38
      %p214 = pneg %p35
      %s215 = smul.u32 8, %s17
      %p216 = scmp.lt.s32.totalorder %s215, 15
      %s217 = scalar_select %p216, %s215, 15
      %s218 = smul.addr %s217, 8
      %s219 = scalar_lea.vmem %s1, %s218
      %p220 = pneg %p64
      %p221 = pneg %p61
      %p222 = pneg %p85
      %p223 = pneg %p82
      %p224 = pneg %p106
      %p225 = pneg %p103
      %p226 = pneg %p132
      %p227 = pneg %p129
      %s228 = smul.u32 8, %s17
      %p229 = scmp.lt.s32.totalorder %s228, 15
      %s230 = scalar_select %p229, %s228, 15
      %s231 = smul.addr %s230, 8
      %s232 = scalar_lea.vmem %s4, %s231
      %p233 = pneg %p158
      %p234 = pneg %p155
      %s235 = smul.u32 8, %s17
      %p236 = scmp.lt.s32.totalorder %s235, 15
      %s237 = scalar_select %p236, %s235, 15
      %s238 = smul.addr %s237, 8
      %s239 = scalar_lea.vmem %s5, %s238
      %s240 = smul.u32 8, %s17
      %p241 = scmp.lt.s32.totalorder %s240, 15
      %s242 = scalar_select %p241, %s240, 15
      %s243 = smul.addr %s242, 8
      %s244 = scalar_lea.vmem %s0, %s243
      %s245 = smul.u32 8, %s17
      %s246 = smul.u32 8, %s17
      %p247 = scmp.lt.s32.totalorder %s246, 15
      %s248 = scalar_select %p247, %s246, 15
      %s249 = smul.addr %s248, 8
      %s250 = scalar_lea.vmem %s1, %s249
      %s251 = smul.u32 8, %s17
      %s252 = smul.u32 8, %s17
      %p253 = scmp.lt.s32.totalorder %s252, 15
      %s254 = scalar_select %p253, %s252, 15
      %s255 = smul.addr %s254, 8
      %s256 = scalar_lea.vmem %s4, %s255
      %s257 = smul.u32 8, %s17
      %s258 = smul.u32 8, %s17
      %p259 = scmp.lt.s32.totalorder %s258, 15
      %s260 = scalar_select %p259, %s258, 15
      %s261 = smul.addr %s260, 8
      %s262 = scalar_lea.vmem %s5, %s261
      %s263 = smul.u32 8, %s17
      %v265 = vld [vmem:[%s2] sm:$0xff]
      %v266 = vld [vmem:[%s2 + $0x8] sm:$0xff]
      %v267 = vld [vmem:[%s2 + $0x10] sm:$0xff]
      %v268 = vld [vmem:[%s2 + $0x18] sm:$0xff]
      %v269 = vpack.c.bf16 %v266, %v265
      %v270 = vpack.c.bf16 %v268, %v267
      %v271 = vld [vmem:[%s3] sm:$0x1]
      %v272 = vld [vmem:[%s244] sm:$0xff]
      %v273 = vld [vmem:[%s244 + $0x8] sm:$0xff]
      %v274 = vld [vmem:[%s244 + $0x10] sm:$0xff]
      %v275 = vld [vmem:[%s244 + $0x18] sm:$0xff]
      %v276 = vld [vmem:[%s244 + $0x20] sm:$0xff]
      %v277 = vld [vmem:[%s244 + $0x28] sm:$0xff]
      %v278 = vld [vmem:[%s244 + $0x30] sm:$0xff]
      %v279 = vld [vmem:[%s244 + $0x38] sm:$0xff]
      %v280 = vpack.c.bf16 %v273, %v272
      %v281 = vpack.c.bf16 %v275, %v274
      %v282 = vpack.c.bf16 %v277, %v276
      %v283 = vpack.c.bf16 %v279, %v278
      %v285 = vlaneseq
      %v286 = vshrl.u32 %v285, 7
      %v287 = vsub.s32 0, %v286
      %v288 = vrot.slane %v271, %v287
      %vm290 = vcmask 261120
      %v292 = vsel %vm290, %v280, 0
      %v295 = vsel %vm290, %v281, 0
      %v298 = vsel %vm290, %v282, 0
      %v301 = vsel %vm290, %v283, 0
      %303 = vmatprep.subr.bf16.mxu0 0
      %304 = vmatpush1.bf16.msra.mxu0 0
      %305 = vmatprep.subr.bf16.mxu0 0
      %306 = vmatpush1.bf16.msra.mxu0 0
      %307 = vmatprep.subr.bf16.mxu0 0
      %308 = vmatpush1.bf16.msra.mxu0 0
      %309 = vmatprep.subr.bf16.mxu0 0
      %310 = vmatpush1.bf16.msra.mxu0 0
      %311 = vmatprep.subr.bf16.mxu0 0
      %312 = vmatpush1.bf16.msra.mxu0 0
      %313 = vmatprep.subr.bf16.mxu0 0
      %314 = vmatpush1.bf16.msra.mxu0 0
      %315 = vmatprep.subr.bf16.mxu0 0
      %316 = vmatpush1.bf16.msra.mxu0 %v270
      %317 = vmatprep.subr.bf16.mxu0 0
      %318 = vmatpush1.bf16.msra.mxu0 %v269
      %319 = vmatprep.subr.bf16.mxu0 0
      %320 = vmatpush2.bf16.msra.mxu0 0
      %321 = vmatprep.subr.bf16.mxu0 0
      %322 = vmatpush2.bf16.msra.mxu0 0
      %323 = vmatprep.subr.bf16.mxu0 0
      %324 = vmatpush2.bf16.msra.mxu0 0
      %325 = vmatprep.subr.bf16.mxu0 0
      %326 = vmatpush2.bf16.msra.mxu0 0
      %327 = vmatprep.subr.bf16.mxu0 0
      %328 = vmatpush2.bf16.msra.mxu0 0
      %329 = vmatprep.subr.bf16.mxu0 0
      %330 = vmatpush2.bf16.msra.mxu0 0
      %331 = vmatprep.subr.bf16.mxu0 0
      %332 = vmatpush2.bf16.msra.mxu0 0
      %333 = vmatprep.subr.bf16.mxu0 0
      %334 = vmatpush2.bf16.msra.mxu0 0
      %335 = vmatprep.mubr.bf16.mxu0 0
      %336 = vmatmul.mubr.bf16.gmra.mxu0 %v292
      %v337 = vpop.f32.mrf.mxu0
      %v338 = vadd.f32 %v288, %v337
      %v339 = vpop.f32.mrf.mxu0
      %v340 = vpop.f32.mrf.mxu0
      %v341 = vadd.f32 %v288, %v340
      %v342 = vpop.f32.mrf.mxu0
      %343 = vmatprep.mubr.bf16.mxu0 0
      %344 = vmatmul.mubr.bf16.gmra.mxu0 %v295
      %v345 = vpop.f32.mrf.mxu0
      %v346 = vadd.f32 %v288, %v345
      %v347 = vpop.f32.mrf.mxu0
      %v348 = vpop.f32.mrf.mxu0
      %v349 = vadd.f32 %v288, %v348
      %v350 = vpop.f32.mrf.mxu0
      %351 = vmatprep.mubr.bf16.mxu0 0
      %352 = vmatmul.mubr.bf16.gmra.mxu0 %v298
      %v353 = vpop.f32.mrf.mxu0
      %v354 = vadd.f32 %v288, %v353
      %v355 = vpop.f32.mrf.mxu0
      %v356 = vpop.f32.mrf.mxu0
      %v357 = vadd.f32 %v288, %v356
      %v358 = vpop.f32.mrf.mxu0
      %359 = vmatprep.mubr.bf16.mxu0 0
      %360 = vmatmul.mubr.bf16.gmra.mxu0 %v301
      %v361 = vpop.f32.mrf.mxu0
      %v362 = vadd.f32 %v288, %v361
      %v363 = vpop.f32.mrf.mxu0
      %v364 = vpop.f32.mrf.mxu0
      %v365 = vadd.f32 %v288, %v364
      %v366 = vpop.f32.mrf.mxu0
      %367 = vdwg.mxu0
      %368 = vst.msk [vmem:[%s256] sm:$0xff] %vm290, %v338
      %369 = vst.msk [vmem:[%s256 + $0x8] sm:$0xff] %vm290, %v341
      %370 = vst.msk [vmem:[%s256 + $0x10] sm:$0xff] %vm290, %v346
      %371 = vst.msk [vmem:[%s256 + $0x18] sm:$0xff] %vm290, %v349
      %372 = vst.msk [vmem:[%s256 + $0x20] sm:$0xff] %vm290, %v354
      %373 = vst.msk [vmem:[%s256 + $0x28] sm:$0xff] %vm290, %v357
      %374 = vst.msk [vmem:[%s256 + $0x30] sm:$0xff] %vm290, %v362
      %375 = vst.msk [vmem:[%s256 + $0x38] sm:$0xff] %vm290, %v365
      %v376 = vld [vmem:[%s250] sm:$0xff]
      %v377 = vld [vmem:[%s250 + $0x8] sm:$0xff]
      %v378 = vld [vmem:[%s250 + $0x10] sm:$0xff]
      %v379 = vld [vmem:[%s250 + $0x18] sm:$0xff]
      %v380 = vld [vmem:[%s250 + $0x20] sm:$0xff]
      %v381 = vld [vmem:[%s250 + $0x28] sm:$0xff]
      %v382 = vld [vmem:[%s250 + $0x30] sm:$0xff]
      %v383 = vld [vmem:[%s250 + $0x38] sm:$0xff]
      %v384 = vpack.c.bf16 %v377, %v376
      %v385 = vpack.c.bf16 %v379, %v378
      %v386 = vpack.c.bf16 %v381, %v380
      %v387 = vpack.c.bf16 %v383, %v382
      %v389 = vsel %vm290, %v384, 0
      %v392 = vsel %vm290, %v385, 0
      %v395 = vsel %vm290, %v386, 0
      %v398 = vsel %vm290, %v387, 0
      %400 = vmatprep.subr.bf16.mxu0 0
      %401 = vmatpush1.bf16.msra.mxu0 0
      %402 = vmatprep.subr.bf16.mxu0 0
      %403 = vmatpush1.bf16.msra.mxu0 0
      %404 = vmatprep.subr.bf16.mxu0 0
      %405 = vmatpush1.bf16.msra.mxu0 0
      %406 = vmatprep.subr.bf16.mxu0 0
      %407 = vmatpush1.bf16.msra.mxu0 0
      %408 = vmatprep.subr.bf16.mxu0 0
      %409 = vmatpush1.bf16.msra.mxu0 0
      %410 = vmatprep.subr.bf16.mxu0 0
      %411 = vmatpush1.bf16.msra.mxu0 0
      %412 = vmatprep.subr.bf16.mxu0 0
      %413 = vmatpush1.bf16.msra.mxu0 %v270
      %414 = vmatprep.subr.bf16.mxu0 0
      %415 = vmatpush1.bf16.msra.mxu0 %v269
      %416 = vmatprep.subr.bf16.mxu0 0
      %417 = vmatpush2.bf16.msra.mxu0 0
      %418 = vmatprep.subr.bf16.mxu0 0
      %419 = vmatpush2.bf16.msra.mxu0 0
      %420 = vmatprep.subr.bf16.mxu0 0
      %421 = vmatpush2.bf16.msra.mxu0 0
      %422 = vmatprep.subr.bf16.mxu0 0
      %423 = vmatpush2.bf16.msra.mxu0 0
      %424 = vmatprep.subr.bf16.mxu0 0
      %425 = vmatpush2.bf16.msra.mxu0 0
      %426 = vmatprep.subr.bf16.mxu0 0
      %427 = vmatpush2.bf16.msra.mxu0 0
      %428 = vmatprep.subr.bf16.mxu0 0
      %429 = vmatpush2.bf16.msra.mxu0 0
      %430 = vmatprep.subr.bf16.mxu0 0
      %431 = vmatpush2.bf16.msra.mxu0 0
      %432 = vmatprep.mubr.bf16.mxu0 0
      %433 = vmatmul.mubr.bf16.gmra.mxu0 %v389
      %v434 = vpop.f32.mrf.mxu0
      %v435 = vadd.f32 %v288, %v434
      %v436 = vpop.f32.mrf.mxu0
      %v437 = vpop.f32.mrf.mxu0
      %v438 = vadd.f32 %v288, %v437
      %v439 = vpop.f32.mrf.mxu0
      %440 = vmatprep.mubr.bf16.mxu0 0
      %441 = vmatmul.mubr.bf16.gmra.mxu0 %v392
      %v442 = vpop.f32.mrf.mxu0
      %v443 = vadd.f32 %v288, %v442
      %v444 = vpop.f32.mrf.mxu0
      %v445 = vpop.f32.mrf.mxu0
      %v446 = vadd.f32 %v288, %v445
      %v447 = vpop.f32.mrf.mxu0
      %448 = vmatprep.mubr.bf16.mxu0 0
      %449 = vmatmul.mubr.bf16.gmra.mxu0 %v395
      %v450 = vpop.f32.mrf.mxu0
      %v451 = vadd.f32 %v288, %v450
      %v452 = vpop.f32.mrf.mxu0
      %v453 = vpop.f32.mrf.mxu0
      %v454 = vadd.f32 %v288, %v453
      %v455 = vpop.f32.mrf.mxu0
      %456 = vmatprep.mubr.bf16.mxu0 0
      %457 = vmatmul.mubr.bf16.gmra.mxu0 %v398
      %v458 = vpop.f32.mrf.mxu0
      %v459 = vadd.f32 %v288, %v458
      %v460 = vpop.f32.mrf.mxu0
      %v461 = vpop.f32.mrf.mxu0
      %v462 = vadd.f32 %v288, %v461
      %v463 = vpop.f32.mrf.mxu0
      %464 = vdwg.mxu0
      %465 = vst.msk [vmem:[%s262] sm:$0xff] %vm290, %v435
      %466 = vst.msk [vmem:[%s262 + $0x8] sm:$0xff] %vm290, %v438
      %467 = vst.msk [vmem:[%s262 + $0x10] sm:$0xff] %vm290, %v443
      %468 = vst.msk [vmem:[%s262 + $0x18] sm:$0xff] %vm290, %v446
      %469 = vst.msk [vmem:[%s262 + $0x20] sm:$0xff] %vm290, %v451
      %470 = vst.msk [vmem:[%s262 + $0x28] sm:$0xff] %vm290, %v454
      %471 = vst.msk [vmem:[%s262 + $0x30] sm:$0xff] %vm290, %v459
      %472 = vst.msk [vmem:[%s262 + $0x38] sm:$0xff] %vm290, %v462
      %s473 = smul.u32 8, %s17
      %p474 = scmp.lt.s32.totalorder %s473, 15
      %s475 = scalar_select %p474, %s473, 15
      %s476 = smul.addr %s475, 8
      %s477 = scalar_lea.vmem %s4, %s476
      %s478 = smul.u32 8, %s17
      %p479 = scmp.lt.s32.totalorder %s478, 15
      %s480 = scalar_select %p479, %s478, 15
      %s481 = smul.addr %s480, 8
      %s482 = scalar_lea.vmem %s5, %s481
      // Predicated region
      $region37: #{vip_block_forward.4} parent=35 // pred_check
        %p483 = pneg %p129
      $region38: #{vip_block_forward.4} parent=35 // pred_check_branch
        %485 = sbr.rel (%p483) target = $region40
      $region39: #{vip_block_forward.4} parent=35 // pred_region
        %s486 = smul.u32 8, %s17
      $region40: #{vip_block_forward.4} parent=35 // pred_fallthru
        _
      // Predicated region
      $region41: #{vip_block_forward.4} parent=35 // pred_check
        %p487 = pneg %p155
      $region42: #{vip_block_forward.4} parent=35 // pred_check_branch
        %489 = sbr.rel (%p487) target = $region44
      $region43: #{vip_block_forward.4} parent=35 // pred_region
        %s490 = smul.u32 8, %s17
      $region44: #{vip_block_forward.4} parent=35 // pred_fallthru
        _
    $region36: #{vip_block_forward.4} parent=5 // pred_fallthru
      _
    %p491 = scmp.le.s32.totalorder 2, %s12
    // Predicated region
    $region45: #{vip_block_forward.4} parent=5 // pred_check
      %p492 = pneg %p491
    $region46: #{vip_block_forward.4} parent=5 // pred_check_branch
      %494 = sbr.rel (%p492) target = $region48
    $region47: #{vip_block_forward.4} parent=5 // pred_region
      %s495 = ssub.s32 %s12, 2
      // Predicated region
      $region49: #{vip_block_forward.4} parent=47 // pred_check
        %p496 = pneg %p135
      $region50: #{vip_block_forward.4} parent=47 // pred_check_branch
        %498 = sbr.rel (%p496) target = $region52
      $region51: #{vip_block_forward.4} parent=47 // pred_region
        %s499 = smul.u32 8, %s18
        %p500 = scmp.lt.s32.totalorder %s499, 15
        %s501 = scalar_select %p500, %s499, 15
        %s502 = smul.addr %s501, 8
        %s503 = scalar_lea.vmem %s4, %s502
      $region52: #{vip_block_forward.4} parent=47 // pred_fallthru
        _
      // Predicated region
      $region53: #{vip_block_forward.4} parent=47 // pred_check
        %p504 = pneg %p161
      $region54: #{vip_block_forward.4} parent=47 // pred_check_branch
        %506 = sbr.rel (%p504) target = $region56
      $region55: #{vip_block_forward.4} parent=47 // pred_region
        %s507 = smul.u32 8, %s18
        %p508 = scmp.lt.s32.totalorder %s507, 15
        %s509 = scalar_select %p508, %s507, 15
        %s510 = smul.addr %s509, 8
        %s511 = scalar_lea.vmem %s5, %s510
      $region56: #{vip_block_forward.4} parent=47 // pred_fallthru
        _
    $region48: #{vip_block_forward.4} parent=5 // pred_fallthru
      _
  $region6: #{vip_block_forward.4} parent=0 // loop_footer
    %s16 = sadd.s32 1, %s12
  $region7: #{vip_block_forward.4} parent=0 // loop_footer_branch
    %11 = sbr.rel target = $region3
  $region8: #{vip_block_forward.4} parent=0 // loop_exit
    _

// kernel: vip_block_forward.5
$region0: #{vip_block_forward.5}
  #allocation0 [shape = 'u32[]', space=smem, size = 0x4, offset = 0x4, fixed_abs, tag = 'smem constant byte address 0x4 - core index']
  #allocation1 [shape = 'u32[144,128]{1,0:T(1,128)}', space=vmem, size = 0x12000, scoped, tag = 'internal scratch']
  %s0 = inlined_call_operand.vmem [shape: f32[2,64,32], index: 0, kind: input, shape index: {}]
  %s1 = inlined_call_operand.vmem [shape: f32[2,64,32], index: 1, kind: input, shape index: {}]
  %s2 = inlined_call_operand.vmem [shape: f32[2,64,32], index: 2, kind: input, shape index: {}]
  %s3 = inlined_call_operand.vmem [shape: f32[2,64,32], index: 3, kind: input, shape index: {}]
  %s4 = inlined_call_operand.vmem [shape: f32[32,32], index: 4, kind: input, shape index: {}]
  %s5 = inlined_call_operand.vmem [shape: f32[32,96], index: 5, kind: input, shape index: {}]
  %s6 = inlined_call_operand.vmem [shape: f32[1,32], index: 6, kind: input, shape index: {}]
  %s7 = inlined_call_operand.vmem [shape: f32[1,32], index: 7, kind: input, shape index: {}]
  %s8 = inlined_call_operand.vmem [shape: f32[32,64], index: 8, kind: input, shape index: {}]
  %s9 = inlined_call_operand.vmem [shape: f32[1,64], index: 9, kind: input, shape index: {}]
  %s10 = inlined_call_operand.vmem [shape: f32[64,32], index: 10, kind: input, shape index: {}]
  %s11 = inlined_call_operand.vmem [shape: f32[1,32], index: 11, kind: input, shape index: {}]
  %s12 = inlined_call_operand.hbm [shape: f32[2,64,32], index: 12, kind: output, shape index: {}]
  %s13 = sld [smem:[#allocation0]]
  $region81: #{vip_block_forward.5} parent=0
    _
  %s15 = ssub.s32 1, %s13
  %s16 = scalar_select 0, %s15, %s13
  $region1: #{vip_block_forward.5} parent=0
    #allocation2 [shape = 'u8[65536]{0}', space=vmem, size = 0x10000, scoped, tag = 'output window, operand 0']
    #allocation3 [shape = 's32[2]{0}', space=sflag, size = 0x8, scoped, tag = 'scoped memory for vip_block_forward.5']
    %17 = vsyncpa [#allocation3], 0
    %s18 = scalar_lea.sflag [#allocation3], 1
    %19 = vsyncpa %s18, 0
    loop: start=0, step=1, limit=4
    $region2: #{vip_block_forward.5} parent=1 // loop_pre_header
      _
    $region3: #{vip_block_forward.5} parent=1 // loop_header
      %s21 = sphi 0, %s25
      %p22 = scmp.ge.s32.totalorder %s21, 4
      %s31 = sphi 0, %s33
      %s34 = sphi 0, %s31
      %s35 = sphi 0, %s34
      %s51 = sphi 0, %s35
      %s57 = sphi 0, %s59
      %s60 = sphi 0, %s57
      %s61 = sphi 0, %s60
      %s77 = sphi 0, %s61
      %s83 = sphi 0, %s85
      %s86 = sphi 0, %s83
      %s87 = sphi 0, %s86
      %s103 = sphi 0, %s87
      %s109 = sphi 0, %s111
      %s112 = sphi 0, %s109
      %s113 = sphi 0, %s112
      %s129 = sphi 0, %s113
      %s133 = sphi 0, %s133
      %s135 = sphi 0, %s133
      %s136 = sphi 0, %s135
      %s150 = sphi 0, %s136
      %s154 = sphi 0, %s154
      %s156 = sphi 0, %s154
      %s157 = sphi 0, %s156
      %s171 = sphi 0, %s157
      %s175 = sphi 0, %s175
      %s177 = sphi 0, %s175
      %s178 = sphi 0, %s177
      %s192 = sphi 0, %s178
      %s196 = sphi 0, %s196
      %s198 = sphi 0, %s196
      %s199 = sphi 0, %s198
      %s213 = sphi 0, %s199
      %s217 = sphi 0, %s217
      %s219 = sphi 0, %s217
      %s220 = sphi 0, %s219
      %s234 = sphi 0, %s220
      %s238 = sphi 0, %s238
      %s240 = sphi 0, %s238
      %s241 = sphi 0, %s240
      %s255 = sphi 0, %s241
      %s259 = sphi 0, %s259
      %s261 = sphi 0, %s259
      %s262 = sphi 0, %s261
      %s276 = sphi 0, %s262
      %s280 = sphi 0, %s280
      %s282 = sphi 0, %s280
      %s283 = sphi 0, %s282
      %s297 = sphi 0, %s283
      %s303 = sphi 0, %s305
      %s306 = sphi 0, %s303
      %s307 = sphi 0, %s306
      %s323 = sphi 0, %s307
    $region4: #{vip_block_forward.5} parent=1 // loop_header_branch
      %24 = sbr.rel (%p22) target = $region8
    $region5: #{vip_block_forward.5} parent=1 // loop_body
      %s26 = ssub.s32 %s21, 1
      %s27 = ssub.s32 %s21, 2
      %s28 = sadd.s32 %s21, 1
      %s29 = ssub.s32 %s21, %s28
      %p30 = scmp.eq.s32.totalorder %s29, 0
      %s32 = sadd.s32 %s31, 1
      %s33 = scalar_select %p30, %s31, %s32
      %p36 = pneg %p30
      %p37 = scmp.eq.s32.totalorder %s21, 1
      %p38 = por %p36, %p37
      %p39 = scmp.ne.s32.totalorder %s31, %s34
      %p40 = scmp.eq.s32.totalorder %s21, 0
      %p41 = por %p39, %p40
      %p42 = scmp.ne.s32.totalorder %s31, %s34
      %p43 = scmp.eq.s32.totalorder %s26, 1
      %p44 = por %p42, %p43
      %p45 = scmp.ne.s32.totalorder %s34, %s35
      %p46 = scmp.eq.s32.totalorder %s26, 0
      %p47 = por %p45, %p46
      %p48 = scmp.ne.s32.totalorder %s34, %s35
      %p49 = scmp.eq.s32.totalorder %s27, 1
      %p50 = por %p48, %p49
      %p52 = scmp.ne.s32.totalorder %s35, %s51
      %p53 = scmp.eq.s32.totalorder %s27, 0
      %p54 = por %p52, %p53
      %s55 = ssub.s32 %s21, %s28
      %p56 = scmp.eq.s32.totalorder %s55, 0
      %s58 = sadd.s32 %s57, 1
      %s59 = scalar_select %p56, %s57, %s58
      %p62 = pneg %p56
      %p63 = scmp.eq.s32.totalorder %s21, 1
      %p64 = por %p62, %p63
      %p65 = scmp.ne.s32.totalorder %s57, %s60
      %p66 = scmp.eq.s32.totalorder %s21, 0
      %p67 = por %p65, %p66
      %p68 = scmp.ne.s32.totalorder %s57, %s60
      %p69 = scmp.eq.s32.totalorder %s26, 1
      %p70 = por %p68, %p69
      %p71 = scmp.ne.s32.totalorder %s60, %s61
      %p72 = scmp.eq.s32.totalorder %s26, 0
      %p73 = por %p71, %p72
      %p74 = scmp.ne.s32.totalorder %s60, %s61
      %p75 = scmp.eq.s32.totalorder %s27, 1
      %p76 = por %p74, %p75
      %p78 = scmp.ne.s32.totalorder %s61, %s77
      %p79 = scmp.eq.s32.totalorder %s27, 0
      %p80 = por %p78, %p79
      %s81 = ssub.s32 %s21, %s28
      %p82 = scmp.eq.s32.totalorder %s81, 0
      %s84 = sadd.s32 %s83, 1
      %s85 = scalar_select %p82, %s83, %s84
      %p88 = pneg %p82
      %p89 = scmp.eq.s32.totalorder %s21, 1
      %p90 = por %p88, %p89
      %p91 = scmp.ne.s32.totalorder %s83, %s86
      %p92 = scmp.eq.s32.totalorder %s21, 0
      %p93 = por %p91, %p92
      %p94 = scmp.ne.s32.totalorder %s83, %s86
      %p95 = scmp.eq.s32.totalorder %s26, 1
      %p96 = por %p94, %p95
      %p97 = scmp.ne.s32.totalorder %s86, %s87
      %p98 = scmp.eq.s32.totalorder %s26, 0
      %p99 = por %p97, %p98
      %p100 = scmp.ne.s32.totalorder %s86, %s87
      %p101 = scmp.eq.s32.totalorder %s27, 1
      %p102 = por %p100, %p101
      %p104 = scmp.ne.s32.totalorder %s87, %s103
      %p105 = scmp.eq.s32.totalorder %s27, 0
      %p106 = por %p104, %p105
      %s107 = ssub.s32 %s21, %s28
      %p108 = scmp.eq.s32.totalorder %s107, 0
      %s110 = sadd.s32 %s109, 1
      %s111 = scalar_select %p108, %s109, %s110
      %p114 = pneg %p108
      %p115 = scmp.eq.s32.totalorder %s21, 1
      %p116 = por %p114, %p115
      %p117 = scmp.ne.s32.totalorder %s109, %s112
      %p118 = scmp.eq.s32.totalorder %s21, 0
      %p119 = por %p117, %p118
      %p120 = scmp.ne.s32.totalorder %s109, %s112
      %p121 = scmp.eq.s32.totalorder %s26, 1
      %p122 = por %p120, %p121
      %p123 = scmp.ne.s32.totalorder %s112, %s113
      %p124 = scmp.eq.s32.totalorder %s26, 0
      %p125 = por %p123, %p124
      %p126 = scmp.ne.s32.totalorder %s112, %s113
      %p127 = scmp.eq.s32.totalorder %s27, 1
      %p128 = por %p126, %p127
      %p130 = scmp.ne.s32.totalorder %s113, %s129
      %p131 = scmp.eq.s32.totalorder %s27, 0
      %p132 = por %p130, %p131
      %s134 = sadd.s32 %s133, 1
      %p137 = scmp.eq.s32.totalorder %s21, 1
      %p138 = scmp.ne.s32.totalorder %s133, %s135
      %p139 = scmp.eq.s32.totalorder %s21, 0
      %p140 = por %p138, %p139
      %p141 = scmp.ne.s32.totalorder %s133, %s135
      %p142 = scmp.eq.s32.totalorder %s26, 1
      %p143 = por %p141, %p142
      %p144 = scmp.ne.s32.totalorder %s135, %s136
      %p145 = scmp.eq.s32.totalorder %s26, 0
      %p146 = por %p144, %p145
      %p147 = scmp.ne.s32.totalorder %s135, %s136
      %p148 = scmp.eq.s32.totalorder %s27, 1
      %p149 = por %p147, %p148
      %p151 = scmp.ne.s32.totalorder %s136, %s150
      %p152 = scmp.eq.s32.totalorder %s27, 0
      %p153 = por %p151, %p152
      %s155 = sadd.s32 %s154, 1
      %p158 = scmp.eq.s32.totalorder %s21, 1
      %p159 = scmp.ne.s32.totalorder %s154, %s156
      %p160 = scmp.eq.s32.totalorder %s21, 0
      %p161 = por %p159, %p160
      %p162 = scmp.ne.s32.totalorder %s154, %s156
      %p163 = scmp.eq.s32.totalorder %s26, 1
      %p164 = por %p162, %p163
      %p165 = scmp.ne.s32.totalorder %s156, %s157
      %p166 = scmp.eq.s32.totalorder %s26, 0
      %p167 = por %p165, %p166
      %p168 = scmp.ne.s32.totalorder %s156, %s157
      %p169 = scmp.eq.s32.totalorder %s27, 1
      %p170 = por %p168, %p169
      %p172 = scmp.ne.s32.totalorder %s157, %s171
      %p173 = scmp.eq.s32.totalorder %s27, 0
      %p174 = por %p172, %p173
      %s176 = sadd.s32 %s175, 1
      %p179 = scmp.eq.s32.totalorder %s21, 1
      %p180 = scmp.ne.s32.totalorder %s175, %s177
      %p181 = scmp.eq.s32.totalorder %s21, 0
      %p182 = por %p180, %p181
      %p183 = scmp.ne.s32.totalorder %s175, %s177
      %p184 = scmp.eq.s32.totalorder %s26, 1
      %p185 = por %p183, %p184
      %p186 = scmp.ne.s32.totalorder %s177, %s178
      %p187 = scmp.eq.s32.totalorder %s26, 0
      %p188 = por %p186, %p187
      %p189 = scmp.ne.s32.totalorder %s177, %s178
      %p190 = scmp.eq.s32.totalorder %s27, 1
      %p191 = por %p189, %p190
      %p193 = scmp.ne.s32.totalorder %s178, %s192
      %p194 = scmp.eq.s32.totalorder %s27, 0
      %p195 = por %p193, %p194
      %s197 = sadd.s32 %s196, 1
      %p200 = scmp.eq.s32.totalorder %s21, 1
      %p201 = scmp.ne.s32.totalorder %s196, %s198
      %p202 = scmp.eq.s32.totalorder %s21, 0
      %p203 = por %p201, %p202
      %p204 = scmp.ne.s32.totalorder %s196, %s198
      %p205 = scmp.eq.s32.totalorder %s26, 1
      %p206 = por %p204, %p205
      %p207 = scmp.ne.s32.totalorder %s198, %s199
      %p208 = scmp.eq.s32.totalorder %s26, 0
      %p209 = por %p207, %p208
      %p210 = scmp.ne.s32.totalorder %s198, %s199
      %p211 = scmp.eq.s32.totalorder %s27, 1
      %p212 = por %p210, %p211
      %p214 = scmp.ne.s32.totalorder %s199, %s213
      %p215 = scmp.eq.s32.totalorder %s27, 0
      %p216 = por %p214, %p215
      %s218 = sadd.s32 %s217, 1
      %p221 = scmp.eq.s32.totalorder %s21, 1
      %p222 = scmp.ne.s32.totalorder %s217, %s219
      %p223 = scmp.eq.s32.totalorder %s21, 0
      %p224 = por %p222, %p223
      %p225 = scmp.ne.s32.totalorder %s217, %s219
      %p226 = scmp.eq.s32.totalorder %s26, 1
      %p227 = por %p225, %p226
      %p228 = scmp.ne.s32.totalorder %s219, %s220
      %p229 = scmp.eq.s32.totalorder %s26, 0
      %p230 = por %p228, %p229
      %p231 = scmp.ne.s32.totalorder %s219, %s220
      %p232 = scmp.eq.s32.totalorder %s27, 1
      %p233 = por %p231, %p232
      %p235 = scmp.ne.s32.totalorder %s220, %s234
      %p236 = scmp.eq.s32.totalorder %s27, 0
      %p237 = por %p235, %p236
      %s239 = sadd.s32 %s238, 1
      %p242 = scmp.eq.s32.totalorder %s21, 1
      %p243 = scmp.ne.s32.totalorder %s238, %s240
      %p244 = scmp.eq.s32.totalorder %s21, 0
      %p245 = por %p243, %p244
      %p246 = scmp.ne.s32.totalorder %s238, %s240
      %p247 = scmp.eq.s32.totalorder %s26, 1
      %p248 = por %p246, %p247
      %p249 = scmp.ne.s32.totalorder %s240, %s241
      %p250 = scmp.eq.s32.totalorder %s26, 0
      %p251 = por %p249, %p250
      %p252 = scmp.ne.s32.totalorder %s240, %s241
      %p253 = scmp.eq.s32.totalorder %s27, 1
      %p254 = por %p252, %p253
      %p256 = scmp.ne.s32.totalorder %s241, %s255
      %p257 = scmp.eq.s32.totalorder %s27, 0
      %p258 = por %p256, %p257
      %s260 = sadd.s32 %s259, 1
      %p263 = scmp.eq.s32.totalorder %s21, 1
      %p264 = scmp.ne.s32.totalorder %s259, %s261
      %p265 = scmp.eq.s32.totalorder %s21, 0
      %p266 = por %p264, %p265
      %p267 = scmp.ne.s32.totalorder %s259, %s261
      %p268 = scmp.eq.s32.totalorder %s26, 1
      %p269 = por %p267, %p268
      %p270 = scmp.ne.s32.totalorder %s261, %s262
      %p271 = scmp.eq.s32.totalorder %s26, 0
      %p272 = por %p270, %p271
      %p273 = scmp.ne.s32.totalorder %s261, %s262
      %p274 = scmp.eq.s32.totalorder %s27, 1
      %p275 = por %p273, %p274
      %p277 = scmp.ne.s32.totalorder %s262, %s276
      %p278 = scmp.eq.s32.totalorder %s27, 0
      %p279 = por %p277, %p278
      %s281 = sadd.s32 %s280, 1
      %p284 = scmp.eq.s32.totalorder %s21, 1
      %p285 = scmp.ne.s32.totalorder %s280, %s282
      %p286 = scmp.eq.s32.totalorder %s21, 0
      %p287 = por %p285, %p286
      %p288 = scmp.ne.s32.totalorder %s280, %s282
      %p289 = scmp.eq.s32.totalorder %s26, 1
      %p290 = por %p288, %p289
      %p291 = scmp.ne.s32.totalorder %s282, %s283
      %p292 = scmp.eq.s32.totalorder %s26, 0
      %p293 = por %p291, %p292
      %p294 = scmp.ne.s32.totalorder %s282, %s283
      %p295 = scmp.eq.s32.totalorder %s27, 1
      %p296 = por %p294, %p295
      %p298 = scmp.ne.s32.totalorder %s283, %s297
      %p299 = scmp.eq.s32.totalorder %s27, 0
      %p300 = por %p298, %p299
      %s301 = ssub.s32 %s21, %s28
      %p302 = scmp.eq.s32.totalorder %s301, 0
      %s304 = sadd.s32 %s303, 1
      %s305 = scalar_select %p302, %s303, %s304
      %p308 = pneg %p302
      %p309 = scmp.eq.s32.totalorder %s21, 1
      %p310 = por %p308, %p309
      %p311 = scmp.ne.s32.totalorder %s303, %s306
      %p312 = scmp.eq.s32.totalorder %s21, 0
      %p313 = por %p311, %p312
      %p314 = scmp.ne.s32.totalorder %s303, %s306
      %p315 = scmp.eq.s32.totalorder %s26, 1
      %p316 = por %p314, %p315
      %p317 = scmp.ne.s32.totalorder %s306, %s307
      %p318 = scmp.eq.s32.totalorder %s26, 0
      %p319 = por %p317, %p318
      %p320 = scmp.ne.s32.totalorder %s306, %s307
      %p321 = scmp.eq.s32.totalorder %s27, 1
      %p322 = por %p320, %p321
      %p324 = scmp.ne.s32.totalorder %s307, %s323
      %p325 = scmp.eq.s32.totalorder %s27, 0
      %p326 = por %p324, %p325
      %p327 = scmp.le.s32.totalorder 1, %s21
      %p328 = scmp.lt.s32.totalorder %s21, 3
      %p329 = pnand %p327, %p328
      %p330 = pneg %p329
      // Predicated region
      $region9: #{vip_block_forward.5} parent=5 // pred_check
        _
      $region10: #{vip_block_forward.5} parent=5 // pred_check_branch
        %332 = sbr.rel (%p329) target = $region12
      $region11: #{vip_block_forward.5} parent=5 // pred_region
        %s333 = ssub.s32 %s21, 1
        // Predicated region
        $region13: #{vip_block_forward.5} parent=11 // pred_check
          %p334 = pneg %p146
        $region14: #{vip_block_forward.5} parent=11 // pred_check_branch
          %336 = sbr.rel (%p334) target = $region16
        $region15: #{vip_block_forward.5} parent=11 // pred_region
          _
        $region16: #{vip_block_forward.5} parent=11 // pred_fallthru
          _
        // Predicated region
        $region17: #{vip_block_forward.5} parent=11 // pred_check
          %p337 = pneg %p167
        $region18: #{vip_block_forward.5} parent=11 // pred_check_branch
          %339 = sbr.rel (%p337) target = $region20
        $region19: #{vip_block_forward.5} parent=11 // pred_region
          _
        $region20: #{vip_block_forward.5} parent=11 // pred_fallthru
          _
        // Predicated region
        $region21: #{vip_block_forward.5} parent=11 // pred_check
          %p340 = pneg %p188
        $region22: #{vip_block_forward.5} parent=11 // pred_check_branch
          %342 = sbr.rel (%p340) target = $region24
        $region23: #{vip_block_forward.5} parent=11 // pred_region
          _
        $region24: #{vip_block_forward.5} parent=11 // pred_fallthru
          _
        // Predicated region
        $region25: #{vip_block_forward.5} parent=11 // pred_check
          %p343 = pneg %p209
        $region26: #{vip_block_forward.5} parent=11 // pred_check_branch
          %345 = sbr.rel (%p343) target = $region28
        $region27: #{vip_block_forward.5} parent=11 // pred_region
          _
        $region28: #{vip_block_forward.5} parent=11 // pred_fallthru
          _
        // Predicated region
        $region29: #{vip_block_forward.5} parent=11 // pred_check
          %p346 = pneg %p230
        $region30: #{vip_block_forward.5} parent=11 // pred_check_branch
          %348 = sbr.rel (%p346) target = $region32
        $region31: #{vip_block_forward.5} parent=11 // pred_region
          _
        $region32: #{vip_block_forward.5} parent=11 // pred_fallthru
          _
        // Predicated region
        $region33: #{vip_block_forward.5} parent=11 // pred_check
          %p349 = pneg %p251
        $region34: #{vip_block_forward.5} parent=11 // pred_check_branch
          %351 = sbr.rel (%p349) target = $region36
        $region35: #{vip_block_forward.5} parent=11 // pred_region
          _
        $region36: #{vip_block_forward.5} parent=11 // pred_fallthru
          _
        // Predicated region
        $region37: #{vip_block_forward.5} parent=11 // pred_check
          %p352 = pneg %p272
        $region38: #{vip_block_forward.5} parent=11 // pred_check_branch
          %354 = sbr.rel (%p352) target = $region40
        $region39: #{vip_block_forward.5} parent=11 // pred_region
          _
        $region40: #{vip_block_forward.5} parent=11 // pred_fallthru
          _
        // Predicated region
        $region41: #{vip_block_forward.5} parent=11 // pred_check
          %p355 = pneg %p293
        $region42: #{vip_block_forward.5} parent=11 // pred_check_branch
          %357 = sbr.rel (%p355) target = $region44
        $region43: #{vip_block_forward.5} parent=11 // pred_region
          _
        $region44: #{vip_block_forward.5} parent=11 // pred_fallthru
          _
      $region12: #{vip_block_forward.5} parent=5 // pred_fallthru
        _
      %p358 = scmp.lt.s32.totalorder %s21, 2
      // Predicated region
      $region45: #{vip_block_forward.5} parent=5 // pred_check
        %p359 = pneg %p358
      $region46: #{vip_block_forward.5} parent=5 // pred_check_branch
        %361 = sbr.rel (%p359) target = $region48
      $region47: #{vip_block_forward.5} parent=5 // pred_region
        // Predicated region
        $region49: #{vip_block_forward.5} parent=47 // pred_check
          %p362 = pneg %p41
        $region50: #{vip_block_forward.5} parent=47 // pred_check_branch
          %364 = sbr.rel (%p362) target = $region52
        $region51: #{vip_block_forward.5} parent=47 // pred_region
          %p365 = scmp.lt.s32.totalorder %s21, 1
          %s366 = scalar_select %p365, %s21, 1
          %s367 = smul.addr %s366, 8
          %s368 = smul.addr %s367, 8
          %s369 = scalar_lea.vmem %s0, %s368
        $region52: #{vip_block_forward.5} parent=47 // pred_fallthru
          _
        // Predicated region
        $region53: #{vip_block_forward.5} parent=47 // pred_check
          %p370 = pneg %p67
        $region54: #{vip_block_forward.5} parent=47 // pred_check_branch
          %372 = sbr.rel (%p370) target = $region56
        $region55: #{vip_block_forward.5} parent=47 // pred_region
          %p373 = scmp.lt.s32.totalorder %s21, 1
          %s374 = scalar_select %p373, %s21, 1
          %s375 = smul.addr %s374, 8
          %s376 = smul.addr %s375, 8
          %s377 = scalar_lea.vmem %s1, %s376
        $region56: #{vip_block_forward.5} parent=47 // pred_fallthru
          _
        // Predicated region
        $region57: #{vip_block_forward.5} parent=47 // pred_check
          %p378 = pneg %p93
        $region58: #{vip_block_forward.5} parent=47 // pred_check_branch
          %380 = sbr.rel (%p378) target = $region60
        $region59: #{vip_block_forward.5} parent=47 // pred_region
          %p381 = scmp.lt.s32.totalorder %s21, 1
          %s382 = scalar_select %p381, %s21, 1
          %s383 = smul.addr %s382, 8
          %s384 = smul.addr %s383, 8
          %s385 = scalar_lea.vmem %s2, %s384
        $region60: #{vip_block_forward.5} parent=47 // pred_fallthru
          _
        // Predicated region
        $region61: #{vip_block_forward.5} parent=47 // pred_check
          %p386 = pneg %p119
        $region62: #{vip_block_forward.5} parent=47 // pred_check_branch
          %388 = sbr.rel (%p386) target = $region64
        $region63: #{vip_block_forward.5} parent=47 // pred_region
          %p389 = scmp.lt.s32.totalorder %s21, 1
          %s390 = scalar_select %p389, %s21, 1
          %s391 = smul.addr %s390, 8
          %s392 = smul.addr %s391, 8
          %s393 = scalar_lea.vmem %s3, %s392
        $region64: #{vip_block_forward.5} parent=47 // pred_fallthru
          _
      $region48: #{vip_block_forward.5} parent=5 // pred_fallthru
        _
      %p394 = scmp.le.s32.totalorder 1, %s21
      %p395 = scmp.lt.s32.totalorder %s21, 3
      %p396 = pnand %p394, %p395
      %p397 = pneg %p396
      // Predicated region
      $region65: #{vip_block_forward.5} parent=5 // pred_check
        _
      $region66: #{vip_block_forward.5} parent=5 // pred_check_branch
        %399 = sbr.rel (%p396) target = $region68
      $region67: #{vip_block_forward.5} parent=5 // pred_region
        %s400 = ssub.s32 %s21, 1
        %p401 = scmp.lt.s32.totalorder %s26, 1
        %s402 = scalar_select %p401, %s26, 1
        %s403 = smul.addr %s402, 8
        %s404 = smul.addr %s403, 8
        %s405 = scalar_lea.vmem %s0, %s404
        %p406 = pneg %p47
        %p407 = pneg %p44
        %p408 = scmp.lt.s32.totalorder %s26, 1
        %s409 = scalar_select %p408, %s26, 1
        %s410 = smul.addr %s409, 8
        %s411 = smul.addr %s410, 8
        %s412 = scalar_lea.vmem %s1, %s411
        %p413 = pneg %p73
        %p414 = pneg %p70
        %p415 = scmp.lt.s32.totalorder %s26, 1
        %s416 = scalar_select %p415, %s26, 1
        %s417 = smul.addr %s416, 8
        %s418 = smul.addr %s417, 8
        %s419 = scalar_lea.vmem %s2, %s418
        %p420 = pneg %p99
        %p421 = pneg %p96
        %p422 = scmp.lt.s32.totalorder %s26, 1
        %s423 = scalar_select %p422, %s26, 1
        %s424 = smul.addr %s423, 8
        %s425 = smul.addr %s424, 8
        %s426 = scalar_lea.vmem %s3, %s425
        %p427 = pneg %p125
        %p428 = pneg %p122
        %p429 = pneg %p146
        %p430 = pneg %p143
        %p431 = pneg %p167
        %p432 = pneg %p164
        %p433 = pneg %p188
        %p434 = pneg %p185
        %p435 = pneg %p209
        %p436 = pneg %p206
        %p437 = pneg %p230
        %p438 = pneg %p227
        %p439 = pneg %p251
        %p440 = pneg %p248
        %p441 = pneg %p272
        %p442 = pneg %p269
        %p443 = pneg %p293
        %p444 = pneg %p290
        %p445 = pneg %p319
        %p446 = pneg %p316
        %s447 = sand.u32 %s306, 1
        %s448 = scalar_lea.sflag [#allocation3], %s447
        %s449 = sand.u32 %s306, 1
        %s450 = smul.addr %s449, 64
        %s451 = scalar_lea.vmem [#allocation2], %s450
        %p452 = scmp.lt.s32.totalorder %s26, 1
        %s453 = scalar_select %p452, %s26, 1
        %s454 = smul.addr %s453, 8
        %s455 = smul.addr %s454, 8
        %s456 = scalar_lea.vmem %s0, %s455
        %p457 = scmp.lt.s32.totalorder %s26, 1
        %s458 = scalar_select %p457, %s26, 1
        %s459 = smul.addr %s458, 8
        %s460 = smul.addr %s459, 8
        %s461 = scalar_lea.vmem %s1, %s460
        %p462 = scmp.lt.s32.totalorder %s26, 1
        %s463 = scalar_select %p462, %s26, 1
        %s464 = smul.addr %s463, 8
        %s465 = smul.addr %s464, 8
        %s466 = scalar_lea.vmem %s2, %s465
        %p467 = scmp.lt.s32.totalorder %s26, 1
        %s468 = scalar_select %p467, %s26, 1
        %s469 = smul.addr %s468, 8
        %s470 = smul.addr %s469, 8
        %s471 = scalar_lea.vmem %s3, %s470
        %v473 = vld [vmem:[%s456] sm:$0xff]
        %v474 = vld [vmem:[%s456 + $0x8] sm:$0xff]
        %v475 = vld [vmem:[%s456 + $0x10] sm:$0xff]
        %v476 = vld [vmem:[%s456 + $0x18] sm:$0xff]
        %v477 = vld [vmem:[%s456 + $0x20] sm:$0xff]
        %v478 = vld [vmem:[%s456 + $0x28] sm:$0xff]
        %v479 = vld [vmem:[%s456 + $0x30] sm:$0xff]
        %v480 = vld [vmem:[%s456 + $0x38] sm:$0xff]
        %v481 = vld [vmem:[%s461] sm:$0xff]
        %v482 = vld [vmem:[%s461 + $0x8] sm:$0xff]
        %v483 = vld [vmem:[%s461 + $0x10] sm:$0xff]
        %v484 = vld [vmem:[%s461 + $0x18] sm:$0xff]
        %v485 = vld [vmem:[%s461 + $0x20] sm:$0xff]
        %v486 = vld [vmem:[%s461 + $0x28] sm:$0xff]
        %v487 = vld [vmem:[%s461 + $0x30] sm:$0xff]
        %v488 = vld [vmem:[%s461 + $0x38] sm:$0xff]
        %v489 = vld [vmem:[%s466] sm:$0xff]
        %v490 = vld [vmem:[%s466 + $0x8] sm:$0xff]
        %v491 = vld [vmem:[%s466 + $0x10] sm:$0xff]
        %v492 = vld [vmem:[%s466 + $0x18] sm:$0xff]
        %v493 = vld [vmem:[%s466 + $0x20] sm:$0xff]
        %v494 = vld [vmem:[%s466 + $0x28] sm:$0xff]
        %v495 = vld [vmem:[%s466 + $0x30] sm:$0xff]
        %v496 = vld [vmem:[%s466 + $0x38] sm:$0xff]
        %v497 = vld [vmem:[%s471] sm:$0xff]
        %v498 = vld [vmem:[%s471 + $0x8] sm:$0xff]
        %v499 = vld [vmem:[%s471 + $0x10] sm:$0xff]
        %v500 = vld [vmem:[%s471 + $0x18] sm:$0xff]
        %v501 = vld [vmem:[%s471 + $0x20] sm:$0xff]
        %v502 = vld [vmem:[%s471 + $0x28] sm:$0xff]
        %v503 = vld [vmem:[%s471 + $0x30] sm:$0xff]
        %v504 = vld [vmem:[%s471 + $0x38] sm:$0xff]
        %v505 = vadd.f32 %v473, %v481
        %v506 = vadd.f32 %v474, %v482
        %v507 = vadd.f32 %v475, %v483
        %v508 = vadd.f32 %v476, %v484
        %v509 = vadd.f32 %v477, %v485
        %v510 = vadd.f32 %v478, %v486
        %v511 = vadd.f32 %v479, %v487
        %v512 = vadd.f32 %v480, %v488
        %v513 = vadd.f32 %v505, %v489
        %v514 = vadd.f32 %v506, %v490
        %v515 = vadd.f32 %v507, %v491
        %v516 = vadd.f32 %v508, %v492
        %v517 = vadd.f32 %v509, %v493
        %v518 = vadd.f32 %v510, %v494
        %v519 = vadd.f32 %v511, %v495
        %v520 = vadd.f32 %v512, %v496
        %vm521 = vcmask 261120
        %v522 = vsel %vm521, %v513, 0.0
        %v523 = vsel %vm521, %v514, 0.0
        %v524 = vadd.f32 %v522, %v523
        %v525 = vsel %vm521, %v515, 0.0
        %v526 = vadd.f32 %v524, %v525
        %v527 = vsel %vm521, %v516, 0.0
        %v528 = vadd.f32 %v526, %v527
        %v529 = vsel %vm521, %v517, 0.0
        %v530 = vadd.f32 %v528, %v529
        %v531 = vsel %vm521, %v518, 0.0
        %v532 = vadd.f32 %v530, %v531
        %v533 = vsel %vm521, %v519, 0.0
        %v534 = vadd.f32 %v532, %v533
        %v535 = vsel %vm521, %v520, 0.0
        %v536 = vadd.f32 %v534, %v535
        %v537 = vrot.slane %v536, 4
        %v538 = vadd.f32 %v536, %v537
        %v539 = vrot.slane %v538, 2
        %v540 = vadd.f32 %v538, %v539
        %v541 = vrot.slane %v540, 1
        %v542 = vadd.f32 %v540, %v541
        %v543 = vld [vmem:[%s4] sm:$0xff]
        %v544 = vld [vmem:[%s4 + $0x8] sm:$0xff]
        %v545 = vld [vmem:[%s4 + $0x10] sm:$0xff]
        %v546 = vld [vmem:[%s4 + $0x18] sm:$0xff]
        %v548 = vsel %vm521, %v542, 0
        %550 = vmatprep.subr.mxu0 0.0
        %551 = vmatpush1.msra.mxu0 0.0
        %552 = vmatprep.subr.mxu0 0.0
        %553 = vmatpush1.msra.mxu0 0.0
        %554 = vmatprep.subr.mxu0 0.0
        %555 = vmatpush1.msra.mxu0 0.0
        %556 = vmatprep.subr.mxu0 0.0
        %557 = vmatpush1.msra.mxu0 0.0
        %558 = vmatprep.subr.mxu0 0.0
        %559 = vmatpush1.msra.mxu0 0.0
        %560 = vmatprep.subr.mxu0 0.0
        %561 = vmatpush1.msra.mxu0 0.0
        %562 = vmatprep.subr.mxu0 0.0
        %563 = vmatpush1.msra.mxu0 0.0
        %564 = vmatprep.subr.mxu0 0.0
        %565 = vmatpush1.msra.mxu0 0.0
        %566 = vmatprep.subr.mxu0 0.0
        %567 = vmatpush1.msra.mxu0 0.0
        %568 = vmatprep.subr.mxu0 0.0
        %569 = vmatpush1.msra.mxu0 0.0
        %570 = vmatprep.subr.mxu0 0.0
        %571 = vmatpush1.msra.mxu0 0.0
        %572 = vmatprep.subr.mxu0 0.0
        %573 = vmatpush1.msra.mxu0 0.0
        %574 = vmatprep.subr.mxu0 0.0
        %575 = vmatpush1.msra.mxu0 %v546
        %576 = vmatprep.subr.mxu0 0.0
        %577 = vmatpush1.msra.mxu0 %v545
        %578 = vmatprep.subr.mxu0 0.0
        %579 = vmatpush1.msra.mxu0 %v544
        %580 = vmatprep.subr.mxu0 0.0
        %581 = vmatpush1.msra.mxu0 %v543
        %582 = vmatprep.subr.mxu0 0.0
        %583 = vmatpush2.msra.mxu0 0.0
        %584 = vmatprep.subr.mxu0 0.0
        %585 = vmatpush2.msra.mxu0 0.0
        %586 = vmatprep.subr.mxu0 0.0
        %587 = vmatpush2.msra.mxu0 0.0
        %588 = vmatprep.subr.mxu0 0.0
        %589 = vmatpush2.msra.mxu0 0.0
        %590 = vmatprep.subr.mxu0 0.0
        %591 = vmatpush2.msra.mxu0 0.0
        %592 = vmatprep.subr.mxu0 0.0
        %593 = vmatpush2.msra.mxu0 0.0
        %594 = vmatprep.subr.mxu0 0.0
        %595 = vmatpush2.msra.mxu0 0.0
        %596 = vmatprep.subr.mxu0 0.0
        %597 = vmatpush2.msra.mxu0 0.0
        %598 = vmatprep.subr.mxu0 0.0
        %599 = vmatpush2.msra.mxu0 0.0
        %600 = vmatprep.subr.mxu0 0.0
        %601 = vmatpush2.msra.mxu0 0.0
        %602 = vmatprep.subr.mxu0 0.0
        %603 = vmatpush2.msra.mxu0 0.0
        %604 = vmatprep.subr.mxu0 0.0
        %605 = vmatpush2.msra.mxu0 0.0
        %606 = vmatprep.subr.mxu0 0.0
        %607 = vmatpush2.msra.mxu0 0.0
        %608 = vmatprep.subr.mxu0 0.0
        %609 = vmatpush2.msra.mxu0 0.0
        %610 = vmatprep.subr.mxu0 0.0
        %611 = vmatpush2.msra.mxu0 0.0
        %612 = vmatprep.subr.mxu0 0.0
        %613 = vmatpush2.msra.mxu0 0.0
        %614 = vmatprep.mubr.f32.mxu0 0.0
        %615 = vmatmul.mubr.f32.gmra.mxu0 %v548
        %v616 = vpop.f32.mrf.mxu0
        %v617 = vadd.f32 0.0, %v616
        %v618 = vpop.f32.mrf.mxu0
        %619 = vdwg.mxu0
        %v620 = vmul.f32 %v617, 0.5
        %v621 = vmul.f32 %v617, 0.044715
        %v622 = vmul.f32 %v621, %v617
        %v623 = vmul.f32 %v622, %v617
        %v624 = vadd.f32 %v617, %v623
        %v625 = vmul.f32 %v624, 0.7978846
        %v626 = vtanh.pop %v625
        %v627 = vadd.f32 %v626, 1.0
        %v628 = vmul.f32 %v620, %v627
        %v629 = vld [vmem:[%s5] sm:$0xff]
        %v630 = vld [vmem:[%s5 + $0x8] sm:$0xff]
        %v631 = vld [vmem:[%s5 + $0x10] sm:$0xff]
        %v632 = vld [vmem:[%s5 + $0x18] sm:$0xff]
        %v634 = vsel %vm521, %v628, 0
        %636 = vmatprep.subr.mxu0 0.0
        %637 = vmatpush1.msra.mxu0 0.0
        %638 = vmatprep.subr.mxu0 0.0
        %639 = vmatpush1.msra.mxu0 0.0
        %640 = vmatprep.subr.mxu0 0.0
        %641 = vmatpush1.msra.mxu0 0.0
        %642 = vmatprep.subr.mxu0 0.0
        %643 = vmatpush1.msra.mxu0 0.0
        %644 = vmatprep.subr.mxu0 0.0
        %645 = vmatpush1.msra.mxu0 0.0
        %646 = vmatprep.subr.mxu0 0.0
        %647 = vmatpush1.msra.mxu0 0.0
        %648 = vmatprep.subr.mxu0 0.0
        %649 = vmatpush1.msra.mxu0 0.0
        %650 = vmatprep.subr.mxu0 0.0
        %651 = vmatpush1.msra.mxu0 0.0
        %652 = vmatprep.subr.mxu0 0.0
        %653 = vmatpush1.msra.mxu0 0.0
        %654 = vmatprep.subr.mxu0 0.0
        %655 = vmatpush1.msra.mxu0 0.0
        %656 = vmatprep.subr.mxu0 0.0
        %657 = vmatpush1.msra.mxu0 0.0
        %658 = vmatprep.subr.mxu0 0.0
        %659 = vmatpush1.msra.mxu0 0.0
        %660 = vmatprep.subr.mxu0 0.0
        %661 = vmatpush1.msra.mxu0 %v632
        %662 = vmatprep.subr.mxu0 0.0
        %663 = vmatpush1.msra.mxu0 %v631
        %664 = vmatprep.subr.mxu0 0.0
        %665 = vmatpush1.msra.mxu0 %v630
        %666 = vmatprep.subr.mxu0 0.0
        %667 = vmatpush1.msra.mxu0 %v629
        %668 = vmatprep.subr.mxu0 0.0
        %669 = vmatpush2.msra.mxu0 0.0
        %670 = vmatprep.subr.mxu0 0.0
        %671 = vmatpush2.msra.mxu0 0.0
        %672 = vmatprep.subr.mxu0 0.0
        %673 = vmatpush2.msra.mxu0 0.0
        %674 = vmatprep.subr.mxu0 0.0
        %675 = vmatpush2.msra.mxu0 0.0
        %676 = vmatprep.subr.mxu0 0.0
        %677 = vmatpush2.msra.mxu0 0.0
        %678 = vmatprep.subr.mxu0 0.0
        %679 = vmatpush2.msra.mxu0 0.0
        %680 = vmatprep.subr.mxu0 0.0
        %681 = vmatpush2.msra.mxu0 0.0
        %682 = vmatprep.subr.mxu0 0.0
        %683 = vmatpush2.msra.mxu0 0.0
        %684 = vmatprep.subr.mxu0 0.0
        %685 = vmatpush2.msra.mxu0 0.0
        %686 = vmatprep.subr.mxu0 0.0
        %687 = vmatpush2.msra.mxu0 0.0
        %688 = vmatprep.subr.mxu0 0.0
        %689 = vmatpush2.msra.mxu0 0.0
        %690 = vmatprep.subr.mxu0 0.0
        %691 = vmatpush2.msra.mxu0 0.0
        %692 = vmatprep.subr.mxu0 0.0
        %693 = vmatpush2.msra.mxu0 0.0
        %694 = vmatprep.subr.mxu0 0.0
        %695 = vmatpush2.msra.mxu0 0.0
        %696 = vmatprep.subr.mxu0 0.0
        %697 = vmatpush2.msra.mxu0 0.0
        %698 = vmatprep.subr.mxu0 0.0
        %699 = vmatpush2.msra.mxu0 0.0
        %700 = vmatprep.mubr.f32.mxu0 0.0
        %701 = vmatmul.mubr.f32.gmra.mxu0 %v634
        %v702 = vpop.f32.mrf.mxu0
        %v703 = vadd.f32 0.0, %v702
        %v704 = vpop.f32.mrf.mxu0
        %705 = vdwg.mxu0
        %707 = vrot.lane.b32.xlu0 %v703, 96
        %v708 = vpop.permute.xlu0 %707
        %v710 = vmax.f32 %v703, %v708
        %711 = vrot.lane.b32.xlu0 %v703, 64
        %v712 = vpop.permute.xlu0 %711
        %v714 = vmax.f32 %v710, %v712
        %v715 = vsub.f32 %v703, %v714
        %v716 = vmul.f32 %v715, 1.442695
        %v717 = vpow.pop %v716
        %719 = vrot.lane.b32.xlu0 %v714, 32
        %v720 = vpop.permute.xlu0 %719
        %v722 = vsub.f32 %v703, %v720
        %v723 = vmul.f32 %v722, 1.442695
        %v724 = vpow.pop %v723
        %725 = vrot.lane.b32.xlu0 %v714, 64
        %v726 = vpop.permute.xlu0 %725
        %v728 = vsub.f32 %v703, %v726
        %v729 = vmul.f32 %v728, 1.442695
        %v730 = vpow.pop %v729
        %732 = vrot.lane.b32.xlu0 %v724, 96
        %v733 = vpop.permute.xlu0 %732
        %v735 = vadd.f32 %v717, %v733
        %737 = vrot.lane.b32.xlu0 %v730, 64
        %v738 = vpop.permute.xlu0 %737
        %v740 = vadd.f32 %v735, %v738
        %v741 = vrcp.pop %v740
        %v742 = vmul.f32 %v717, %v741
        %v743 = vlaneseq
        %v744 = vshrl.u32 %v743, 7
        %v745 = vsub.s32 0, %v744
        %v746 = vrot.slane %v742, %v745
        %v747 = vmul.f32 %v746, %v473
        %v748 = vmul.f32 %v746, %v474
        %v749 = vmul.f32 %v746, %v475
        %v750 = vmul.f32 %v746, %v476
        %v751 = vmul.f32 %v746, %v477
        %v752 = vmul.f32 %v746, %v478
        %v753 = vmul.f32 %v746, %v479
        %v754 = vmul.f32 %v746, %v480
        %756 = vrot.lane.b32.xlu0 %v741, 32
        %v757 = vpop.permute.xlu0 %756
        %v759 = vmul.f32 %v724, %v757
        %v760 = vlaneseq
        %v761 = vshrl.u32 %v760, 7
        %v762 = vsub.s32 0, %v761
        %v763 = vrot.slane %v759, %v762
        %772 = vrot.lane.b32.xlu0 %v481, 32
        %v773 = vpop.permute.xlu0 %772
        %774 = vrot.lane.b32.xlu0 %v482, 32
        %v775 = vpop.permute.xlu0 %774
        %776 = vrot.lane.b32.xlu0 %v483, 32
        %v777 = vpop.permute.xlu0 %776
        %778 = vrot.lane.b32.xlu0 %v484, 32
        %v779 = vpop.permute.xlu0 %778
        %780 = vrot.lane.b32.xlu0 %v485, 32
        %v781 = vpop.permute.xlu0 %780
        %782 = vrot.lane.b32.xlu0 %v486, 32
        %v783 = vpop.permute.xlu0 %782
        %784 = vrot.lane.b32.xlu0 %v487, 32
        %v785 = vpop.permute.xlu0 %784
        %786 = vrot.lane.b32.xlu0 %v488, 32
        %v787 = vpop.permute.xlu0 %786
        %v796 = vmul.f32 %v763, %v773
        %v797 = vmul.f32 %v763, %v775
        %v798 = vmul.f32 %v763, %v777
        %v799 = vmul.f32 %v763, %v779
        %v800 = vmul.f32 %v763, %v781
        %v801 = vmul.f32 %v763, %v783
        %v802 = vmul.f32 %v763, %v785
        %v803 = vmul.f32 %v763, %v787
        %812 = vrot.lane.b32.xlu0 %v796, 96
        %v813 = vpop.permute.xlu0 %812
        %814 = vrot.lane.b32.xlu0 %v797, 96
        %v815 = vpop.permute.xlu0 %814
        %816 = vrot.lane.b32.xlu0 %v798, 96
        %v817 = vpop.permute.xlu0 %816
        %818 = vrot.lane.b32.xlu0 %v799, 96
        %v819 = vpop.permute.xlu0 %818
        %820 = vrot.lane.b32.xlu0 %v800, 96
        %v821 = vpop.permute.xlu0 %820
        %822 = vrot.lane.b32.xlu0 %v801, 96
        %v823 = vpop.permute.xlu0 %822
        %824 = vrot.lane.b32.xlu0 %v802, 96
        %v825 = vpop.permute.xlu0 %824
        %826 = vrot.lane.b32.xlu0 %v803, 96
        %v827 = vpop.permute.xlu0 %826
        %v836 = vadd.f32 %v747, %v813
        %v837 = vadd.f32 %v748, %v815
        %v838 = vadd.f32 %v749, %v817
        %v839 = vadd.f32 %v750, %v819
        %v840 = vadd.f32 %v751, %v821
        %v841 = vadd.f32 %v752, %v823
        %v842 = vadd.f32 %v753, %v825
        %v843 = vadd.f32 %v754, %v827
        %844 = vrot.lane.b32.xlu0 %v741, 64
        %v845 = vpop.permute.xlu0 %844
        %v847 = vmul.f32 %v730, %v845
        %v848 = vlaneseq
        %v849 = vshrl.u32 %v848, 7
        %v850 = vsub.s32 0, %v849
        %v851 = vrot.slane %v847, %v850
        %860 = vrot.lane.b32.xlu0 %v489, 64
        %v861 = vpop.permute.xlu0 %860
        %862 = vrot.lane.b32.xlu0 %v490, 64
        %v863 = vpop.permute.xlu0 %862
        %864 = vrot.lane.b32.xlu0 %v491, 64
        %v865 = vpop.permute.xlu0 %864
        %866 = vrot.lane.b32.xlu0 %v492, 64
        %v867 = vpop.permute.xlu0 %866
        %868 = vrot.lane.b32.xlu0 %v493, 64
        %v869 = vpop.permute.xlu0 %868
        %870 = vrot.lane.b32.xlu0 %v494, 64
        %v871 = vpop.permute.xlu0 %870
        %872 = vrot.lane.b32.xlu0 %v495, 64
        %v873 = vpop.permute.xlu0 %872
        %874 = vrot.lane.b32.xlu0 %v496, 64
        %v875 = vpop.permute.xlu0 %874
        %v884 = vmul.f32 %v851, %v861
        %v885 = vmul.f32 %v851, %v863
        %v886 = vmul.f32 %v851, %v865
        %v887 = vmul.f32 %v851, %v867
        %v888 = vmul.f32 %v851, %v869
        %v889 = vmul.f32 %v851, %v871
        %v890 = vmul.f32 %v851, %v873
        %v891 = vmul.f32 %v851, %v875
        %900 = vrot.lane.b32.xlu0 %v884, 64
        %v901 = vpop.permute.xlu0 %900
        %902 = vrot.lane.b32.xlu0 %v885, 64
        %v903 = vpop.permute.xlu0 %902
        %904 = vrot.lane.b32.xlu0 %v886, 64
        %v905 = vpop.permute.xlu0 %904
        %906 = vrot.lane.b32.xlu0 %v887, 64
        %v907 = vpop.permute.xlu0 %906
        %908 = vrot.lane.b32.xlu0 %v888, 64
        %v909 = vpop.permute.xlu0 %908
        %910 = vrot.lane.b32.xlu0 %v889, 64
        %v911 = vpop.permute.xlu0 %910
        %912 = vrot.lane.b32.xlu0 %v890, 64
        %v913 = vpop.permute.xlu0 %912
        %914 = vrot.lane.b32.xlu0 %v891, 64
        %v915 = vpop.permute.xlu0 %914
        %v924 = vadd.f32 %v836, %v901
        %v925 = vadd.f32 %v837, %v903
        %v926 = vadd.f32 %v838, %v905
        %v927 = vadd.f32 %v839, %v907
        %v928 = vadd.f32 %v840, %v909
        %v929 = vadd.f32 %v841, %v911
        %v930 = vadd.f32 %v842, %v913
        %v931 = vadd.f32 %v843, %v915
        %v932 = vadd.f32 %v924, %v497
        %v933 = vadd.f32 %v925, %v498
        %v934 = vadd.f32 %v926, %v499
        %v935 = vadd.f32 %v927, %v500
        %v936 = vadd.f32 %v928, %v501
        %v937 = vadd.f32 %v929, %v502
        %v938 = vadd.f32 %v930, %v503
        %v939 = vadd.f32 %v931, %v504
        %v940 = vsel %vm521, %v932, 0.0
        %941 = vadd.xlane.f32.xlu0 %v940
        %v942 = vpop.xlane.xlu0 %941
        %v943 = vsel %vm521, %v933, 0.0
        %944 = vadd.xlane.f32.xlu0 %v943
        %v945 = vpop.xlane.xlu0 %944
        %v946 = vsel %vm521, %v934, 0.0
        %947 = vadd.xlane.f32.xlu0 %v946
        %v948 = vpop.xlane.xlu0 %947
        %v949 = vsel %vm521, %v935, 0.0
        %950 = vadd.xlane.f32.xlu0 %v949
        %v951 = vpop.xlane.xlu0 %950
        %v952 = vsel %vm521, %v936, 0.0
        %953 = vadd.xlane.f32.xlu0 %v952
        %v954 = vpop.xlane.xlu0 %953
        %v955 = vsel %vm521, %v937, 0.0
        %956 = vadd.xlane.f32.xlu0 %v955
        %v957 = vpop.xlane.xlu0 %956
        %v958 = vsel %vm521, %v938, 0.0
        %959 = vadd.xlane.f32.xlu0 %v958
        %v960 = vpop.xlane.xlu0 %959
        %v961 = vsel %vm521, %v939, 0.0
        %962 = vadd.xlane.f32.xlu0 %v961
        %v963 = vpop.xlane.xlu0 %962
        %v964 = vrcp.pop 32.0
        %v965 = vmul.f32 %v942, %v964
        %v966 = vmul.f32 %v945, %v964
        %v967 = vmul.f32 %v948, %v964
        %v968 = vmul.f32 %v951, %v964
        %v969 = vmul.f32 %v954, %v964
        %v970 = vmul.f32 %v957, %v964
        %v971 = vmul.f32 %v960, %v964
        %v972 = vmul.f32 %v963, %v964
        %v973 = vsub.f32 %v932, %v965
        %v974 = vsub.f32 %v933, %v966
        %v975 = vsub.f32 %v934, %v967
        %v976 = vsub.f32 %v935, %v968
        %v977 = vsub.f32 %v936, %v969
        %v978 = vsub.f32 %v937, %v970
        %v979 = vsub.f32 %v938, %v971
        %v980 = vsub.f32 %v939, %v972
        %v981 = vmul.f32 %v973, %v973
        %v982 = vmul.f32 %v974, %v974
        %v983 = vmul.f32 %v975, %v975
        %v984 = vmul.f32 %v976, %v976
        %v985 = vmul.f32 %v977, %v977
        %v986 = vmul.f32 %v978, %v978
        %v987 = vmul.f32 %v979, %v979
        %v988 = vmul.f32 %v980, %v980
        %v989 = vsel %vm521, %v981, 0.0
        %990 = vadd.xlane.f32.xlu0 %v989
        %v991 = vpop.xlane.xlu0 %990
        %v992 = vsel %vm521, %v982, 0.0
        %993 = vadd.xlane.f32.xlu0 %v992
        %v994 = vpop.xlane.xlu0 %993
        %v995 = vsel %vm521, %v983, 0.0
        %996 = vadd.xlane.f32.xlu0 %v995
        %v997 = vpop.xlane.xlu0 %996
        %v998 = vsel %vm521, %v984, 0.0
        %999 = vadd.xlane.f32.xlu0 %v998
        %v1000 = vpop.xlane.xlu0 %999
        %v1001 = vsel %vm521, %v985, 0.0
        %1002 = vadd.xlane.f32.xlu0 %v1001
        %v1003 = vpop.xlane.xlu0 %1002
        %v1004 = vsel %vm521, %v986, 0.0
        %1005 = vadd.xlane.f32.xlu0 %v1004
        %v1006 = vpop.xlane.xlu0 %1005
        %v1007 = vsel %vm521, %v987, 0.0
        %1008 = vadd.xlane.f32.xlu0 %v1007
        %v1009 = vpop.xlane.xlu0 %1008
        %v1010 = vsel %vm521, %v988, 0.0
        %1011 = vadd.xlane.f32.xlu0 %v1010
        %v1012 = vpop.xlane.xlu0 %1011
        %v1013 = vmul.f32 %v991, %v964
        %v1014 = vmul.f32 %v994, %v964
        %v1015 = vmul.f32 %v997, %v964
        %v1016 = vmul.f32 %v1000, %v964
        %v1017 = vmul.f32 %v1003, %v964
        %v1018 = vmul.f32 %v1006, %v964
        %v1019 = vmul.f32 %v1009, %v964
        %v1020 = vmul.f32 %v1012, %v964
        %v1021 = vadd.f32 %v1013, 1e-05
        %v1022 = vadd.f32 %v1014, 1e-05
        %v1023 = vadd.f32 %v1015, 1e-05
        %v1024 = vadd.f32 %v1016, 1e-05
        %v1025 = vadd.f32 %v1017, 1e-05
        %v1026 = vadd.f32 %v1018, 1e-05
        %v1027 = vadd.f32 %v1019, 1e-05
        %v1028 = vadd.f32 %v1020, 1e-05
        %v1029 = vrsqrt.pop %v1021
        %v1030 = vrsqrt.pop %v1022
        %v1031 = vrsqrt.pop %v1023
        %v1032 = vrsqrt.pop %v1024
        %v1033 = vrsqrt.pop %v1025
        %v1034 = vrsqrt.pop %v1026
        %v1035 = vrsqrt.pop %v1027
        %v1036 = vrsqrt.pop %v1028
        %v1037 = vmul.f32 %v973, %v1029
        %v1038 = vmul.f32 %v974, %v1030
        %v1039 = vmul.f32 %v975, %v1031
        %v1040 = vmul.f32 %v976, %v1032
        %v1041 = vmul.f32 %v977, %v1033
        %v1042 = vmul.f32 %v978, %v1034
        %v1043 = vmul.f32 %v979, %v1035
        %v1044 = vmul.f32 %v980, %v1036
        %v1045 = vld [vmem:[%s6] sm:$0x1]
        %v1047 = vlaneseq
        %v1048 = vshrl.u32 %v1047, 7
        %v1049 = vsub.s32 0, %v1048
        %v1050 = vrot.slane %v1045, %v1049
        %v1052 = vmul.f32 %v1037, %v1050
        %v1053 = vmul.f32 %v1038, %v1050
        %v1054 = vmul.f32 %v1039, %v1050
        %v1055 = vmul.f32 %v1040, %v1050
        %v1056 = vmul.f32 %v1041, %v1050
        %v1057 = vmul.f32 %v1042, %v1050
        %v1058 = vmul.f32 %v1043, %v1050
        %v1059 = vmul.f32 %v1044, %v1050
        %v1060 = vld [vmem:[%s7] sm:$0x1]
        %v1062 = vlaneseq
        %v1063 = vshrl.u32 %v1062, 7
        %v1064 = vsub.s32 0, %v1063
        %v1065 = vrot.slane %v1060, %v1064
        %v1067 = vadd.f32 %v1052, %v1065
        %v1068 = vadd.f32 %v1053, %v1065
        %v1069 = vadd.f32 %v1054, %v1065
        %v1070 = vadd.f32 %v1055, %v1065
        %v1071 = vadd.f32 %v1056, %v1065
        %v1072 = vadd.f32 %v1057, %v1065
        %v1073 = vadd.f32 %v1058, %v1065
        %v1074 = vadd.f32 %v1059, %v1065
        %v1075 = vpack.c.bf16 %v1068, %v1067
        %v1076 = vpack.c.bf16 %v1070, %v1069
        %v1077 = vpack.c.bf16 %v1072, %v1071
        %v1078 = vpack.c.bf16 %v1074, %v1073
        %v1079 = vld [vmem:[%s8] sm:$0xff]
        %v1080 = vld [vmem:[%s8 + $0x8] sm:$0xff]
        %v1081 = vld [vmem:[%s8 + $0x10] sm:$0xff]
        %v1082 = vld [vmem:[%s8 + $0x18] sm:$0xff]
        %v1083 = vpack.c.bf16 %v1080, %v1079
        %v1084 = vpack.c.bf16 %v1082, %v1081
        %v1085 = vld [vmem:[%s9] sm:$0x1]
        %v1087 = vlaneseq
        %v1088 = vshrl.u32 %v1087, 7
        %v1089 = vsub.s32 0, %v1088
        %v1090 = vrot.slane %v1085, %v1089
        %v1093 = vsel %vm521, %v1075, 0
        %v1096 = vsel %vm521, %v1076, 0
        %v1099 = vsel %vm521, %v1077, 0
        %v1102 = vsel %vm521, %v1078, 0
        %1104 = vmatprep.subr.bf16.mxu0 0
        %1105 = vmatpush1.bf16.msra.mxu0 0
        %1106 = vmatprep.subr.bf16.mxu0 0
        %1107 = vmatpush1.bf16.msra.mxu0 0
        %1108 = vmatprep.subr.bf16.mxu0 0
        %1109 = vmatpush1.bf16.msra.mxu0 0
        %1110 = vmatprep.subr.bf16.mxu0 0
        %1111 = vmatpush1.bf16.msra.mxu0 0
        %1112 = vmatprep.subr.bf16.mxu0 0
        %1113 = vmatpush1.bf16.msra.mxu0 0
        %1114 = vmatprep.subr.bf16.mxu0 0
        %1115 = vmatpush1.bf16.msra.mxu0 0
        %1116 = vmatprep.subr.bf16.mxu0 0
        %1117 = vmatpush1.bf16.msra.mxu0 %v1084
        %1118 = vmatprep.subr.bf16.mxu0 0
        %1119 = vmatpush1.bf16.msra.mxu0 %v1083
        %1120 = vmatprep.subr.bf16.mxu0 0
        %1121 = vmatpush2.bf16.msra.mxu0 0
        %1122 = vmatprep.subr.bf16.mxu0 0
        %1123 = vmatpush2.bf16.msra.mxu0 0
        %1124 = vmatprep.subr.bf16.mxu0 0
        %1125 = vmatpush2.bf16.msra.mxu0 0
        %1126 = vmatprep.subr.bf16.mxu0 0
        %1127 = vmatpush2.bf16.msra.mxu0 0
        %1128 = vmatprep.subr.bf16.mxu0 0
        %1129 = vmatpush2.bf16.msra.mxu0 0
        %1130 = vmatprep.subr.bf16.mxu0 0
        %1131 = vmatpush2.bf16.msra.mxu0 0
        %1132 = vmatprep.subr.bf16.mxu0 0
        %1133 = vmatpush2.bf16.msra.mxu0 0
        %1134 = vmatprep.subr.bf16.mxu0 0
        %1135 = vmatpush2.bf16.msra.mxu0 0
        %1136 = vmatprep.mubr.bf16.mxu0 0
        %1137 = vmatmul.mubr.bf16.gmra.mxu0 %v1093
        %v1138 = vpop.f32.mrf.mxu0
        %v1139 = vadd.f32 %v1090, %v1138
        %v1140 = vpop.f32.mrf.mxu0
        %v1141 = vpop.f32.mrf.mxu0
        %v1142 = vadd.f32 %v1090, %v1141
        %v1143 = vpop.f32.mrf.mxu0
        %1144 = vmatprep.mubr.bf16.mxu0 0
        %1145 = vmatmul.mubr.bf16.gmra.mxu0 %v1096
        %v1146 = vpop.f32.mrf.mxu0
        %v1147 = vadd.f32 %v1090, %v1146
        %v1148 = vpop.f32.mrf.mxu0
        %v1149 = vpop.f32.mrf.mxu0
        %v1150 = vadd.f32 %v1090, %v1149
        %v1151 = vpop.f32.mrf.mxu0
        %1152 = vmatprep.mubr.bf16.mxu0 0
        %1153 = vmatmul.mubr.bf16.gmra.mxu0 %v1099
        %v1154 = vpop.f32.mrf.mxu0
        %v1155 = vadd.f32 %v1090, %v1154
        %v1156 = vpop.f32.mrf.mxu0
        %v1157 = vpop.f32.mrf.mxu0
        %v1158 = vadd.f32 %v1090, %v1157
        %v1159 = vpop.f32.mrf.mxu0
        %1160 = vmatprep.mubr.bf16.mxu0 0
        %1161 = vmatmul.mubr.bf16.gmra.mxu0 %v1102
        %v1162 = vpop.f32.mrf.mxu0
        %v1163 = vadd.f32 %v1090, %v1162
        %v1164 = vpop.f32.mrf.mxu0
        %v1165 = vpop.f32.mrf.mxu0
        %v1166 = vadd.f32 %v1090, %v1165
        %v1167 = vpop.f32.mrf.mxu0
        %1168 = vdwg.mxu0
        %v1169 = vmul.f32 %v1139, 0.5
        %v1170 = vmul.f32 %v1142, 0.5
        %v1171 = vmul.f32 %v1147, 0.5
        %v1172 = vmul.f32 %v1150, 0.5
        %v1173 = vmul.f32 %v1155, 0.5
        %v1174 = vmul.f32 %v1158, 0.5
        %v1175 = vmul.f32 %v1163, 0.5
        %v1176 = vmul.f32 %v1166, 0.5
        %v1177 = vmul.f32 %v1139, 0.044715
        %v1178 = vmul.f32 %v1142, 0.044715
        %v1179 = vmul.f32 %v1147, 0.044715
        %v1180 = vmul.f32 %v1150, 0.044715
        %v1181 = vmul.f32 %v1155, 0.044715
        %v1182 = vmul.f32 %v1158, 0.044715
        %v1183 = vmul.f32 %v1163, 0.044715
        %v1184 = vmul.f32 %v1166, 0.044715
        %v1185 = vmul.f32 %v1177, %v1139
        %v1186 = vmul.f32 %v1178, %v1142
        %v1187 = vmul.f32 %v1179, %v1147
        %v1188 = vmul.f32 %v1180, %v1150
        %v1189 = vmul.f32 %v1181, %v1155
        %v1190 = vmul.f32 %v1182, %v1158
        %v1191 = vmul.f32 %v1183, %v1163
        %v1192 = vmul.f32 %v1184, %v1166
        %v1193 = vmul.f32 %v1185, %v1139
        %v1194 = vmul.f32 %v1186, %v1142
        %v1195 = vmul.f32 %v1187, %v1147
        %v1196 = vmul.f32 %v1188, %v1150
        %v1197 = vmul.f32 %v1189, %v1155
        %v1198 = vmul.f32 %v1190, %v1158
        %v1199 = vmul.f32 %v1191, %v1163
        %v1200 = vmul.f32 %v1192, %v1166
        %v1201 = vadd.f32 %v1139, %v1193
        %v1202 = vadd.f32 %v1142, %v1194
        %v1203 = vadd.f32 %v1147, %v1195
        %v1204 = vadd.f32 %v1150, %v1196
        %v1205 = vadd.f32 %v1155, %v1197
        %v1206 = vadd.f32 %v1158, %v1198
        %v1207 = vadd.f32 %v1163, %v1199
        %v1208 = vadd.f32 %v1166, %v1200
        %v1209 = vmul.f32 %v1201, 0.7978846
        %v1210 = vmul.f32 %v1202, 0.7978846
        %v1211 = vmul.f32 %v1203, 0.7978846
        %v1212 = vmul.f32 %v1204, 0.7978846
        %v1213 = vmul.f32 %v1205, 0.7978846
        %v1214 = vmul.f32 %v1206, 0.7978846
        %v1215 = vmul.f32 %v1207, 0.7978846
        %v1216 = vmul.f32 %v1208, 0.7978846
        %v1217 = vtanh.pop %v1209
        %v1218 = vtanh.pop %v1210
        %v1219 = vtanh.pop %v1211
        %v1220 = vtanh.pop %v1212
        %v1221 = vtanh.pop %v1213
        %v1222 = vtanh.pop %v1214
        %v1223 = vtanh.pop %v1215
        %v1224 = vtanh.pop %v1216
        %v1225 = vadd.f32 %v1217, 1.0
        %v1226 = vadd.f32 %v1218, 1.0
        %v1227 = vadd.f32 %v1219, 1.0
        %v1228 = vadd.f32 %v1220, 1.0
        %v1229 = vadd.f32 %v1221, 1.0
        %v1230 = vadd.f32 %v1222, 1.0
        %v1231 = vadd.f32 %v1223, 1.0
        %v1232 = vadd.f32 %v1224, 1.0
        %v1233 = vmul.f32 %v1169, %v1225
        %v1234 = vmul.f32 %v1170, %v1226
        %v1235 = vmul.f32 %v1171, %v1227
        %v1236 = vmul.f32 %v1172, %v1228
        %v1237 = vmul.f32 %v1173, %v1229
        %v1238 = vmul.f32 %v1174, %v1230
        %v1239 = vmul.f32 %v1175, %v1231
        %v1240 = vmul.f32 %v1176, %v1232
        %v1241 = vpack.c.bf16 %v1234, %v1233
        %v1242 = vpack.c.bf16 %v1236, %v1235
        %v1243 = vpack.c.bf16 %v1238, %v1237
        %v1244 = vpack.c.bf16 %v1240, %v1239
        %v1245 = vld [vmem:[%s10] sm:$0xff]
        %v1246 = vld [vmem:[%s10 + $0x8] sm:$0xff]
        %v1247 = vld [vmem:[%s10 + $0x10] sm:$0xff]
        %v1248 = vld [vmem:[%s10 + $0x18] sm:$0xff]
        %v1249 = vld [vmem:[%s10 + $0x20] sm:$0xff]
        %v1250 = vld [vmem:[%s10 + $0x28] sm:$0xff]
        %v1251 = vld [vmem:[%s10 + $0x30] sm:$0xff]
        %v1252 = vld [vmem:[%s10 + $0x38] sm:$0xff]
        %v1253 = vpack.c.bf16 %v1246, %v1245
        %v1254 = vpack.c.bf16 %v1248, %v1247
        %v1255 = vpack.c.bf16 %v1250, %v1249
        %v1256 = vpack.c.bf16 %v1252, %v1251
        %v1257 = vld [vmem:[%s11] sm:$0x1]
        %v1259 = vlaneseq
        %v1260 = vshrl.u32 %v1259, 7
        %v1261 = vsub.s32 0, %v1260
        %v1262 = vrot.slane %v1257, %v1261
        %vm1264 = vcmask 523264
        %v1266 = vsel %vm1264, %v1241, 0
        %v1269 = vsel %vm1264, %v1242, 0
        %v1272 = vsel %vm1264, %v1243, 0
        %v1275 = vsel %vm1264, %v1244, 0
        %1277 = vmatprep.subr.bf16.mxu0 0
        %1278 = vmatpush1.bf16.msra.mxu0 0
        %1279 = vmatprep.subr.bf16.mxu0 0
        %1280 = vmatpush1.bf16.msra.mxu0 0
        %1281 = vmatprep.subr.bf16.mxu0 0
        %1282 = vmatpush1.bf16.msra.mxu0 0
        %1283 = vmatprep.subr.bf16.mxu0 0
        %1284 = vmatpush1.bf16.msra.mxu0 0
        %1285 = vmatprep.subr.bf16.mxu0 0
        %1286 = vmatpush1.bf16.msra.mxu0 %v1256
        %1287 = vmatprep.subr.bf16.mxu0 0
        %1288 = vmatpush1.bf16.msra.mxu0 %v1255
        %1289 = vmatprep.subr.bf16.mxu0 0
        %1290 = vmatpush1.bf16.msra.mxu0 %v1254
        %1291 = vmatprep.subr.bf16.mxu0 0
        %1292 = vmatpush1.bf16.msra.mxu0 %v1253
        %1293 = vmatprep.subr.bf16.mxu0 0
        %1294 = vmatpush2.bf16.msra.mxu0 0
        %1295 = vmatprep.subr.bf16.mxu0 0
        %1296 = vmatpush2.bf16.msra.mxu0 0
        %1297 = vmatprep.subr.bf16.mxu0 0
        %1298 = vmatpush2.bf16.msra.mxu0 0
        %1299 = vmatprep.subr.bf16.mxu0 0
        %1300 = vmatpush2.bf16.msra.mxu0 0
        %1301 = vmatprep.subr.bf16.mxu0 0
        %1302 = vmatpush2.bf16.msra.mxu0 0
        %1303 = vmatprep.subr.bf16.mxu0 0
        %1304 = vmatpush2.bf16.msra.mxu0 0
        %1305 = vmatprep.subr.bf16.mxu0 0
        %1306 = vmatpush2.bf16.msra.mxu0 0
        %1307 = vmatprep.subr.bf16.mxu0 0
        %1308 = vmatpush2.bf16.msra.mxu0 0
        %1309 = vmatprep.mubr.bf16.mxu0 0
        %1310 = vmatmul.mubr.bf16.gmra.mxu0 %v1266
        %v1311 = vpop.f32.mrf.mxu0
        %v1312 = vadd.f32 %v1262, %v1311
        %v1313 = vpop.f32.mrf.mxu0
        %v1314 = vpop.f32.mrf.mxu0
        %v1315 = vadd.f32 %v1262, %v1314
        %v1316 = vpop.f32.mrf.mxu0
        %1317 = vmatprep.mubr.bf16.mxu0 0
        %1318 = vmatmul.mubr.bf16.gmra.mxu0 %v1269
        %v1319 = vpop.f32.mrf.mxu0
        %v1320 = vadd.f32 %v1262, %v1319
        %v1321 = vpop.f32.mrf.mxu0
        %v1322 = vpop.f32.mrf.mxu0
        %v1323 = vadd.f32 %v1262, %v1322
        %v1324 = vpop.f32.mrf.mxu0
        %1325 = vmatprep.mubr.bf16.mxu0 0
        %1326 = vmatmul.mubr.bf16.gmra.mxu0 %v1272
        %v1327 = vpop.f32.mrf.mxu0
        %v1328 = vadd.f32 %v1262, %v1327
        %v1329 = vpop.f32.mrf.mxu0
        %v1330 = vpop.f32.mrf.mxu0
        %v1331 = vadd.f32 %v1262, %v1330
        %v1332 = vpop.f32.mrf.mxu0
        %1333 = vmatprep.mubr.bf16.mxu0 0
        %1334 = vmatmul.mubr.bf16.gmra.mxu0 %v1275
        %v1335 = vpop.f32.mrf.mxu0
        %v1336 = vadd.f32 %v1262, %v1335
        %v1337 = vpop.f32.mrf.mxu0
        %v1338 = vpop.f32.mrf.mxu0
        %v1339 = vadd.f32 %v1262, %v1338
        %v1340 = vpop.f32.mrf.mxu0
        %1341 = vdwg.mxu0
        %v1342 = vadd.f32 %v1312, %v932
        %v1343 = vadd.f32 %v1315, %v933
        %v1344 = vadd.f32 %v1320, %v934
        %v1345 = vadd.f32 %v1323, %v935
        %v1346 = vadd.f32 %v1328, %v936
        %v1347 = vadd.f32 %v1331, %v937
        %v1348 = vadd.f32 %v1336, %v938
        %v1349 = vadd.f32 %v1339, %v939
        %1350 = vst.msk [vmem:[%s451] sm:$0xff] %vm521, %v1342
        %1351 = vst.msk [vmem:[%s451 + $0x8] sm:$0xff] %vm521, %v1343
        %1352 = vst.msk [vmem:[%s451 + $0x10] sm:$0xff] %vm521, %v1344
        %1353 = vst.msk [vmem:[%s451 + $0x18] sm:$0xff] %vm521, %v1345
        %1354 = vst.msk [vmem:[%s451 + $0x20] sm:$0xff] %vm521, %v1346
        %1355 = vst.msk [vmem:[%s451 + $0x28] sm:$0xff] %vm521, %v1347
        %1356 = vst.msk [vmem:[%s451 + $0x30] sm:$0xff] %vm521, %v1348
        %1357 = vst.msk [vmem:[%s451 + $0x38] sm:$0xff] %vm521, %v1349
        %s1358 = sand.u32 %s306, 1
        %s1359 = scalar_lea.sflag [#allocation3], %s1358
        %s1360 = sand.u32 %s306, 1
        %s1361 = smul.addr %s1360, 64
        %s1362 = scalar_lea.vmem [#allocation2], %s1361
        // Predicated region
        $region69: #{vip_block_forward.5} parent=67 // pred_check
          %p1363 = pneg %p316
        $region70: #{vip_block_forward.5} parent=67 // pred_check_branch
          %1365 = sbr.rel (%p1363) target = $region72
        $region71: #{vip_block_forward.5} parent=67 // pred_region
          %s1367 = ssub.s32 1024, 1024
          %1368 = vsyncadd %s1359, %s1367
          %s1369 = smul.addr %s26, 8
          %s1370 = smul.addr %s1369, 128
          %s1371 = scalar_lea.hbm %s12, %s1370
          %s1372 = sshll.u32 %s1362, 4
          %s1373 = int_to_ptr.vmem [resolvable:$true] %s1372
          %1378 = dma.vmem_to_hbm [thread:$0]  %s1373, 1024, %s1371, %s1359, 128, 128, 8
        $region72: #{vip_block_forward.5} parent=67 // pred_fallthru
          _
      $region68: #{vip_block_forward.5} parent=5 // pred_fallthru
        _
      %p1379 = scmp.le.s32.totalorder 2, %s21
      // Predicated region
      $region73: #{vip_block_forward.5} parent=5 // pred_check
        %p1380 = pneg %p1379
      $region74: #{vip_block_forward.5} parent=5 // pred_check_branch
        %1382 = sbr.rel (%p1380) target = $region76
      $region75: #{vip_block_forward.5} parent=5 // pred_region
        %s1383 = ssub.s32 %s21, 2
        // Predicated region
        $region77: #{vip_block_forward.5} parent=75 // pred_check
          %p1384 = pneg %p322
        $region78: #{vip_block_forward.5} parent=75 // pred_check_branch
          %1386 = sbr.rel (%p1384) target = $region80
        $region79: #{vip_block_forward.5} parent=75 // pred_region
          %s1387 = sand.u32 %s307, 1
          %s1388 = scalar_lea.sflag [#allocation3], %s1387
          %s1389 = sand.u32 %s307, 1
          %s1390 = smul.addr %s1389, 64
          %s1391 = scalar_lea.vmem [#allocation2], %s1390
          %1392 = dma.done %s1388, 1024
        $region80: #{vip_block_forward.5} parent=75 // pred_fallthru
          _
      $region76: #{vip_block_forward.5} parent=5 // pred_fallthru
        _
    $region6: #{vip_block_forward.5} parent=1 // loop_footer
      %s25 = sadd.s32 1, %s21
    $region7: #{vip_block_forward.5} parent=1 // loop_footer_branch
      %20 = sbr.rel target = $region3
    $region8: #{vip_block_forward.5} parent=1 // loop_exit
      _
    %1393 = vsyncpa [#allocation3], 1
    %s1394 = scalar_lea.sflag [#allocation3], 1
    %1395 = vsyncpa %s1394, 1

</llo_original>
